<compile_context>
chip_gen: v7x
topology: tpu7x:2x2x1
jax: 0.10.0
libtpu: 0.0.40
codegen_flags: <defaults>
</compile_context>

<pallas_src>
import jax
import jax.numpy as jnp
from jax.experimental import pallas as pl
from jax.experimental.pallas import tpu as pltpu

_LANE = 128
_HALO = 24   # 6-element conv halo rounded up so every layer's M dim is 8-aligned


def _round_up(x, m):
    return ((x + m - 1) // m) * m


def _make_tripleconv_kernel(tl_out, use_im2col):
    """tl_out: output rows produced per grid step (multiple of 8)."""
    win = tl_out + _HALO   # input rows fetched per tile

    def conv3_relu(h, lo, w_ref, b_ref):
        # h: (R, C) compute dtype; produce rows [0, lo) of the valid conv.
        # lo is always a multiple of 8 so MXU M dims / stores stay 8-aligned.
        c = h.shape[1]
        if use_im2col:
            # One deep matmul per layer (best on v6e/v7x 256-wide MXUs).
            hw = jnp.concatenate([h[0:lo, :], h[1:lo + 1, :], h[2:lo + 2, :]],
                                 axis=1)                       # (lo, 3*C)
            acc = jnp.dot(hw, w_ref[...],
                          preferred_element_type=jnp.float32)  # f32 accumulate
        else:
            # v5e-friendly: three K=C dots, no im2col concat materialization.
            w = w_ref[...]
            acc = jnp.dot(h[0:lo, :], w[0:c, :],
                          preferred_element_type=jnp.float32)
            acc += jnp.dot(h[1:lo + 1, :], w[c:2 * c, :],
                           preferred_element_type=jnp.float32)
            acc += jnp.dot(h[2:lo + 2, :], w[2 * c:3 * c, :],
                           preferred_element_type=jnp.float32)
        return jnp.maximum(acc + b_ref[...], 0.0)              # f32 epilogue

    def kernel(x_hbm, w1_ref, b1_ref, w2_ref, b2_ref, w3_ref, b3_ref,
               o_ref, xbuf, dma_sem):
        b = pl.program_id(0)
        t = pl.program_id(1)
        nt = pl.num_programs(1)
        slot = t % 2

        def window_copy(tt, s):
            start = pl.multiple_of(tt * tl_out, 8)
            return pltpu.make_async_copy(
                x_hbm.at[b, pl.ds(start, win), :], xbuf.at[s], dma_sem.at[s])

        # Prime: the first tile of each batch row fetches its own window
        # (megacore-safe: priming is per batch row, not per core).
        @pl.when(t == 0)
        def _():
            window_copy(t, 0).start()

        # Prefetch the next tile's window (same batch row) into the other
        # slot; it lands while this step's matmuls run.
        @pl.when(t + 1 < nt)
        def _():
            window_copy(t + 1, 1 - slot).start()

        # Wait for this step's window (started at step t-1, or just primed).
        window_copy(t, slot).wait()

        h0 = xbuf[slot]                                        # (win, Cin_p)
        cd = h0.dtype
        h1 = conv3_relu(h0, tl_out + 16, w1_ref, b1_ref)       # (TL+16, Cout_p)
        h2 = conv3_relu(h1.astype(cd), tl_out + 8, w2_ref, b2_ref)
        h3 = conv3_relu(h2.astype(cd), tl_out, w3_ref, b3_ref)  # (TL, Cout_p)
        # TODO(synk): for out_layout=="NCL", transpose the (TL, Cout_p) tile
        # here on the XLU and store an NCL block directly, skipping the
        # wrapper's extra HBM transpose pass over the f32 output.
        o_ref[0] = h3.astype(o_ref.dtype)                      # lane-dense store

    return kernel


def tripleconv_pallas(x_ncl, params, *, tl=2048, compute_dtype=jnp.bfloat16,
                      out_dtype=jnp.float32, out_layout="NCL",
                      use_im2col=True, vmem_budget_bytes=44 * 1024 * 1024):
    """x_ncl: (B, Cin, L) float32. Returns (B, Cout, L-6) in out_dtype
    (or (B, L-6, Cout) when out_layout == 'NLC'). Set out_dtype=bf16 when the
    consumer tolerates it (halves the dominant HBM stream on v6e)."""
    (w1, b1), (w2, b2), (w3, b3) = params
    B, Cin, L = x_ncl.shape
    Cout = w1.shape[2]
    assert L >= 7, "need L >= 7 so all three valid convs have output"
    Lo = L - 6

    Cin_p = _round_up(Cin, _LANE)
    Cout_p = _round_up(Cout, _LANE)
    cds = jnp.dtype(compute_dtype).itemsize
    ods = jnp.dtype(out_dtype).itemsize

    # --- channel-aware tile size: as large as fits the VMEM budget ----------
    def vmem_est(tl_):
        xw = 2 * (tl_ + _HALO) * Cin_p * cds                       # 2-slot window
        wts = 2 * (3 * Cin_p * Cout_p + 6 * Cout_p * Cout_p) * cds  # weights (x2, conservative)
        bias = 2 * 3 * Cout_p * 4
        outb = 2 * tl_ * Cout_p * ods                               # double-buffered out block
        cmax = max(Cin_p, Cout_p)
        tmp = 2 * (tl_ + _HALO) * (3 * cmax * cds + Cout_p * 4 + Cout_p * cds)
        return xw + wts + bias + outb + tmp

    TL = max(8, min(_round_up(tl, 8), _round_up(Lo, 8)))
    while TL > 8 and vmem_est(TL) > vmem_budget_bytes:
        TL = max(8, _round_up(TL // 2, 8))
    # TODO(synk): add a Cout tiling grid axis for very wide layers; without
    # channel tiling the 3*Cout_p^2 weights alone can exceed v7x's 64 MiB VMEM.
    nt = -(-Lo // TL)
    Lo_pad = nt * TL
    L_pad = Lo_pad + _HALO

    # NCL -> NLC, zero-pad channels to 128 lanes and length to the tiled extent.
    # TODO(synk): fold this transpose/pad pass into the kernel's window DMA
    # (strided NCL fetch + in-kernel XLU transpose) if it shows up in profiles.
    x_nlc = jnp.transpose(x_ncl, (0, 2, 1))
    x_nlc = jnp.pad(x_nlc, ((0, 0), (0, L_pad - L), (0, Cin_p - Cin)))
    x_nlc = x_nlc.astype(compute_dtype)

    def prep_w(w, cin_p):
        k, cin, cout = w.shape
        wp = jnp.pad(w, ((0, 0), (0, cin_p - cin), (0, Cout_p - cout)))
        return wp.reshape(k * cin_p, Cout_p).astype(compute_dtype)

    def prep_b(bv):
        return jnp.pad(bv, (0, Cout_p - bv.shape[0])).reshape(
            1, Cout_p).astype(jnp.float32)

    w1p, w2p, w3p = prep_w(w1, Cin_p), prep_w(w2, Cout_p), prep_w(w3, Cout_p)
    b1p, b2p, b3p = prep_b(b1), prep_b(b2), prep_b(b3)

    flops = 2 * B * nt * ((TL + 16) * 3 * Cin_p * Cout_p
                          + (TL + 8) * 3 * Cout_p * Cout_p
                          + TL * 3 * Cout_p * Cout_p)
    bytes_accessed = (B * nt * (TL + _HALO) * Cin_p * cds
                      + int(w1p.size + w2p.size + w3p.size) * cds
                      + int(b1p.size + b2p.size + b3p.size) * 4
                      + B * Lo_pad * Cout_p * ods)

    const = lambda b, t: (0, 0)   # weights/biases resident across all steps
    # TODO(synk): pipeline_mode=pl.Buffered(1) on the constant weight specs
    # would drop the unused second buffer (matters for wide Cout on v7x).
    out_nlc = pl.pallas_call(
        _make_tripleconv_kernel(TL, use_im2col),
        out_shape=jax.ShapeDtypeStruct((B, Lo_pad, Cout_p), out_dtype),
        grid_spec=pltpu.PrefetchScalarGridSpec(
            num_scalar_prefetch=0,
            grid=(B, nt),
            in_specs=[
                pl.BlockSpec(memory_space=pl.ANY),        # x stays in HBM
                pl.BlockSpec((3 * Cin_p, Cout_p), const),
                pl.BlockSpec((1, Cout_p), const),
                pl.BlockSpec((3 * Cout_p, Cout_p), const),
                pl.BlockSpec((1, Cout_p), const),
                pl.BlockSpec((3 * Cout_p, Cout_p), const),
                pl.BlockSpec((1, Cout_p), const),
            ],
            out_specs=pl.BlockSpec((1, TL, Cout_p), lambda b, t: (b, t, 0)),
            scratch_shapes=[
                pltpu.VMEM((2, TL + _HALO, Cin_p), compute_dtype),
                pltpu.SemaphoreType.DMA((2,)),
            ],
        ),
        compiler_params=pltpu.CompilerParams(
            # Batch axis parallel (fills both v7x TensorCores); the L-tile axis
            # is "arbitrary" so the cross-step window prefetch is well defined.
            dimension_semantics=("parallel", "arbitrary"),
            vmem_limit_bytes=int(min(96 * 1024 * 1024,
                                     max(48 * 1024 * 1024,
                                         int(1.3 * vmem_est(TL))))),
        ),
        cost_estimate=pl.CostEstimate(flops=int(flops), transcendentals=0,
                                      bytes_accessed=int(bytes_accessed)),
    )(x_nlc, w1p, b1p, w2p, b2p, w3p, b3p)

    out_nlc = out_nlc[:, :Lo, :Cout]
    if out_layout == "NLC":
        return out_nlc                          # skip the extra HBM transpose
    return jnp.transpose(out_nlc, (0, 2, 1))    # NCL to match the nn.Module


def init_params(key, ch_in, ch_out):
    """Mimic PyTorch Conv1d default init; weights stored as (K=3, Cin, Cout)."""
    params = []
    cin = ch_in
    for _ in range(3):
        key, kw, kb = jax.random.split(key, 3)
        fan_in = cin * 3
        bound = 1.0 / (fan_in ** 0.5)
        w = jax.random.uniform(kw, (3, cin, ch_out), jnp.float32, -bound, bound)
        b = jax.random.uniform(kb, (ch_out,), jnp.float32, -bound, bound)
        params.append((w, b))
        cin = ch_out
    return params


def tripleconv_ref(x_ncl, params):
    """Pure-JAX reference using lax.conv (NCL, valid padding)."""
    h = x_ncl
    for (w, b) in params:
        w_oik = jnp.transpose(w, (2, 1, 0))     # (K,Cin,Cout) -> (Cout,Cin,K)
        h = jax.lax.conv_general_dilated(
            h, w_oik, window_strides=(1,), padding="VALID",
            dimension_numbers=("NCH", "OIH", "NCH"))
        h = jnp.maximum(h + b[None, :, None], 0.0)
    return h


if __name__ == "__main__":
    key = jax.random.PRNGKey(0)

    # --- Test 1: tiny module shapes, f32 operands, im2col path, tight tol ----
    B, CH_IN, CH_OUT, L = 2, 4, 8, 16
    key, kx, kp = jax.random.split(key, 3)
    x = jax.random.normal(kx, (B, CH_IN, L), jnp.float32)
    params = init_params(kp, CH_IN, CH_OUT)

    out = jax.block_until_ready(
        tripleconv_pallas(x, params, compute_dtype=jnp.float32))
    ref = tripleconv_ref(x, params)
    assert out.shape == (B, CH_OUT, L - 6), out.shape
    assert jnp.allclose(out, ref, atol=1e-4, rtol=1e-4), "f32 mismatch vs ref"

    # --- Test 2: multiple L-tiles (exercises the cross-step DMA prefetch) ----
    B2, CI2, CO2, L2 = 2, 16, 32, 300
    key, kx2, kp2 = jax.random.split(key, 3)
    x2 = jax.random.normal(kx2, (B2, CI2, L2), jnp.float32)
    params2 = init_params(kp2, CI2, CO2)

    out2 = jax.block_until_ready(
        tripleconv_pallas(x2, params2, tl=128, compute_dtype=jnp.bfloat16))
    ref2 = tripleconv_ref(x2, params2)
    assert out2.shape == (B2, CO2, L2 - 6), out2.shape
    assert jnp.allclose(out2, ref2, atol=1e-1, rtol=1e-1), "bf16 mismatch vs ref"

    # --- Test 3: three-dot (v5e-style) path, f32, tight tolerance -------------
    out3 = jax.block_until_ready(
        tripleconv_pallas(x, params, compute_dtype=jnp.float32,
                          use_im2col=False))
    assert jnp.allclose(out3, ref, atol=1e-4, rtol=1e-4), "3-dot mismatch vs ref"

    print("KERNEL_OK")
</pallas_src>

<mosaic_0001>
module attributes {stable_mosaic.version = 11 : i64} {
  func.func @kernel(%arg0: i32, %arg1: i32, %arg2: memref<2x40x128xf32, #tpu.memory_space<any>>, %arg3: memref<384x128xf32, #tpu.memory_space<vmem>>, %arg4: memref<1x128xf32, #tpu.memory_space<vmem>>, %arg5: memref<384x128xf32, #tpu.memory_space<vmem>>, %arg6: memref<1x128xf32, #tpu.memory_space<vmem>>, %arg7: memref<384x128xf32, #tpu.memory_space<vmem>>, %arg8: memref<1x128xf32, #tpu.memory_space<vmem>>, %arg9: memref<1x16x128xf32, #tpu.memory_space<vmem>>, %arg10: memref<2x40x128xf32, #tpu.memory_space<vmem>>, %arg11: memref<2x!tpu.dma_semaphore, #tpu.memory_space<semaphore_mem>>) attributes {dimension_semantics = [#tpu.dimension_semantics<parallel>, #tpu.dimension_semantics<arbitrary>], iteration_bounds = array<i64: 2, 1>, scalar_prefetch = 0 : i64, scratch_operands = 2 : i64, tpu.core_type = #tpu.core_type<tc>, window_params = [{}, {pipeline_mode = #tpu.pipeline_mode<synchronous>, transform_indices = @transform_1, window_bounds = array<i64: 384, 128>}, {pipeline_mode = #tpu.pipeline_mode<synchronous>, transform_indices = @transform_2, window_bounds = array<i64: 1, 128>}, {pipeline_mode = #tpu.pipeline_mode<synchronous>, transform_indices = @transform_3, window_bounds = array<i64: 384, 128>}, {pipeline_mode = #tpu.pipeline_mode<synchronous>, transform_indices = @transform_4, window_bounds = array<i64: 1, 128>}, {pipeline_mode = #tpu.pipeline_mode<synchronous>, transform_indices = @transform_5, window_bounds = array<i64: 384, 128>}, {pipeline_mode = #tpu.pipeline_mode<synchronous>, transform_indices = @transform_6, window_bounds = array<i64: 1, 128>}, {transform_indices = @transform_7, window_bounds = array<i64: 1, 16, 128>}]} {
    %c2_i32 = arith.constant 2 : i32
    %c0_i32 = arith.constant 0 : i32
    %0 = arith.cmpi eq, %c2_i32, %c0_i32 : i32
    %c1_i32 = arith.constant 1 : i32
    %1 = arith.select %0, %c1_i32, %c2_i32 : i32
    %2 = arith.remsi %arg1, %1 : i32
    %c0_i32_0 = arith.constant 0 : i32
    %3 = arith.cmpi ne, %2, %c0_i32_0 : i32
    %c0_i32_1 = arith.constant 0 : i32
    %4 = arith.cmpi slt, %2, %c0_i32_1 : i32
    %c0_i32_2 = arith.constant 0 : i32
    %5 = arith.cmpi slt, %1, %c0_i32_2 : i32
    %6 = arith.xori %4, %5 : i1
    %7 = arith.andi %6, %3 : i1
    %8 = arith.addi %2, %1 : i32
    %9 = arith.select %7, %8, %2 : i32
    %c0_i32_3 = arith.constant 0 : i32
    %10 = arith.cmpi eq, %arg1, %c0_i32_3 : i32
    %11 = arith.extui %10 : i1 to i32
    %c0_i32_4 = arith.constant 0 : i32
    %12 = arith.cmpi ne, %11, %c0_i32_4 : i32
    scf.if %12 {
      %c16_i32_32 = arith.constant 16 : i32
      %64 = arith.muli %arg1, %c16_i32_32 : i32
      %65 = tpu.assume_multiple %64, 8 : i32
      %c0_i32_33 = arith.constant 0 : i32
      %c0_i32_34 = arith.constant 0 : i32
      %c0_i32_35 = arith.constant 0 : i32
      %66 = tpu.memref_slice %arg2[%arg0, %65, %c0_i32_35] : memref<2x40x128xf32, #tpu.memory_space<any>> -> memref<1x40x128xf32, #tpu.memory_space<any>>
      %67 = tpu.memref_squeeze %66 : memref<1x40x128xf32, #tpu.memory_space<any>> -> memref<40x128xf32, #tpu.memory_space<any>>
      %c0_i32_36 = arith.constant 0 : i32
      %c0_i32_37 = arith.constant 0 : i32
      %68 = tpu.memref_slice %arg10[%c0_i32_33, %c0_i32_36, %c0_i32_37] : memref<2x40x128xf32, #tpu.memory_space<vmem>> -> memref<1x40x128xf32, #tpu.memory_space<vmem>>
      %69 = tpu.memref_squeeze %68 : memref<1x40x128xf32, #tpu.memory_space<vmem>> -> memref<40x128xf32, #tpu.memory_space<vmem>>
      %70 = tpu.memref_slice %arg11[%c0_i32_34] : memref<2x!tpu.dma_semaphore, #tpu.memory_space<semaphore_mem>> -> memref<1x!tpu.dma_semaphore, #tpu.memory_space<semaphore_mem>>
      %71 = tpu.memref_squeeze %70 : memref<1x!tpu.dma_semaphore, #tpu.memory_space<semaphore_mem>> -> memref<!tpu.dma_semaphore, #tpu.memory_space<semaphore_mem>>
      tpu.enqueue_dma source(%67 : memref<40x128xf32, #tpu.memory_space<any>>) target(%69 : memref<40x128xf32, #tpu.memory_space<vmem>>) target_semaphore(%71 : memref<!tpu.dma_semaphore, #tpu.memory_space<semaphore_mem>>)
    } else {
    }
    %c1_i32_5 = arith.constant 1 : i32
    %13 = arith.addi %arg1, %c1_i32_5 : i32
    %c1_i32_6 = arith.constant 1 : i32
    %14 = arith.cmpi slt, %13, %c1_i32_6 : i32
    %15 = arith.extui %14 : i1 to i32
    %c0_i32_7 = arith.constant 0 : i32
    %16 = arith.cmpi ne, %15, %c0_i32_7 : i32
    scf.if %16 {
      %c1_i32_32 = arith.constant 1 : i32
      %64 = arith.addi %arg1, %c1_i32_32 : i32
      %c1_i32_33 = arith.constant 1 : i32
      %65 = arith.subi %c1_i32_33, %9 : i32
      %c16_i32_34 = arith.constant 16 : i32
      %66 = arith.muli %64, %c16_i32_34 : i32
      %67 = tpu.assume_multiple %66, 8 : i32
      %c0_i32_35 = arith.constant 0 : i32
      %68 = tpu.memref_slice %arg2[%arg0, %67, %c0_i32_35] : memref<2x40x128xf32, #tpu.memory_space<any>> -> memref<1x40x128xf32, #tpu.memory_space<any>>
      %69 = tpu.memref_squeeze %68 : memref<1x40x128xf32, #tpu.memory_space<any>> -> memref<40x128xf32, #tpu.memory_space<any>>
      %c0_i32_36 = arith.constant 0 : i32
      %c0_i32_37 = arith.constant 0 : i32
      %70 = tpu.memref_slice %arg10[%65, %c0_i32_36, %c0_i32_37] : memref<2x40x128xf32, #tpu.memory_space<vmem>> -> memref<1x40x128xf32, #tpu.memory_space<vmem>>
      %71 = tpu.memref_squeeze %70 : memref<1x40x128xf32, #tpu.memory_space<vmem>> -> memref<40x128xf32, #tpu.memory_space<vmem>>
      %72 = tpu.memref_slice %arg11[%65] : memref<2x!tpu.dma_semaphore, #tpu.memory_space<semaphore_mem>> -> memref<1x!tpu.dma_semaphore, #tpu.memory_space<semaphore_mem>>
      %73 = tpu.memref_squeeze %72 : memref<1x!tpu.dma_semaphore, #tpu.memory_space<semaphore_mem>> -> memref<!tpu.dma_semaphore, #tpu.memory_space<semaphore_mem>>
      tpu.enqueue_dma source(%69 : memref<40x128xf32, #tpu.memory_space<any>>) target(%71 : memref<40x128xf32, #tpu.memory_space<vmem>>) target_semaphore(%73 : memref<!tpu.dma_semaphore, #tpu.memory_space<semaphore_mem>>)
    } else {
    }
    %c16_i32 = arith.constant 16 : i32
    %17 = arith.muli %arg1, %c16_i32 : i32
    %18 = tpu.assume_multiple %17, 8 : i32
    %c0_i32_8 = arith.constant 0 : i32
    %19 = tpu.memref_slice %arg2[%arg0, %18, %c0_i32_8] : memref<2x40x128xf32, #tpu.memory_space<any>> -> memref<1x40x128xf32, #tpu.memory_space<any>>
    %20 = tpu.memref_squeeze %19 : memref<1x40x128xf32, #tpu.memory_space<any>> -> memref<40x128xf32, #tpu.memory_space<any>>
    %c0_i32_9 = arith.constant 0 : i32
    %c0_i32_10 = arith.constant 0 : i32
    %21 = tpu.memref_slice %arg10[%9, %c0_i32_9, %c0_i32_10] : memref<2x40x128xf32, #tpu.memory_space<vmem>> -> memref<1x40x128xf32, #tpu.memory_space<vmem>>
    %22 = tpu.memref_squeeze %21 : memref<1x40x128xf32, #tpu.memory_space<vmem>> -> memref<40x128xf32, #tpu.memory_space<vmem>>
    %23 = tpu.memref_slice %arg11[%9] : memref<2x!tpu.dma_semaphore, #tpu.memory_space<semaphore_mem>> -> memref<1x!tpu.dma_semaphore, #tpu.memory_space<semaphore_mem>>
    %24 = tpu.memref_squeeze %23 : memref<1x!tpu.dma_semaphore, #tpu.memory_space<semaphore_mem>> -> memref<!tpu.dma_semaphore, #tpu.memory_space<semaphore_mem>>
    tpu.wait_dma2 semaphore(%24 : memref<!tpu.dma_semaphore, #tpu.memory_space<semaphore_mem>>) src(%20 : memref<40x128xf32, #tpu.memory_space<any>>) dst(%22 : memref<40x128xf32, #tpu.memory_space<vmem>>)
    %25 = arith.index_cast %9 : i32 to index
    %c0 = arith.constant 0 : index
    %c0_11 = arith.constant 0 : index
    %26 = vector.load %arg10[%25, %c0, %c0_11] : memref<2x40x128xf32, #tpu.memory_space<vmem>>, vector<1x40x128xf32>
    %27 = vector.shape_cast %26 : vector<1x40x128xf32> to vector<40x128xf32>
    %28 = vector.extract_strided_slice %27 {offsets = [0, 0], sizes = [32, 128], strides = [1, 1]} : vector<40x128xf32> to vector<32x128xf32>
    %29 = vector.extract_strided_slice %27 {offsets = [1, 0], sizes = [32, 128], strides = [1, 1]} : vector<40x128xf32> to vector<32x128xf32>
    %30 = vector.extract_strided_slice %27 {offsets = [2, 0], sizes = [32, 128], strides = [1, 1]} : vector<40x128xf32> to vector<32x128xf32>
    %31 = tpu.concatenate %28, %29, %30 in 1 : vector<32x128xf32>, vector<32x128xf32>, vector<32x128xf32> -> vector<32x384xf32>
    %c0_12 = arith.constant 0 : index
    %c0_13 = arith.constant 0 : index
    %32 = vector.load %arg3[%c0_12, %c0_13] : memref<384x128xf32, #tpu.memory_space<vmem>>, vector<384x128xf32>
    %cst = arith.constant dense<0.000000e+00> : vector<32x128xf32>
    %33 = tpu.matmul %31, %32, %cst {dimension_numbers = #tpu.dot_dimension_numbers<[1], [0], [0], [1], [0, 0, 1, 1], [], []>} : vector<32x384xf32>, vector<384x128xf32>, vector<32x128xf32> -> vector<32x128xf32>
    %c0_14 = arith.constant 0 : index
    %c0_15 = arith.constant 0 : index
    %34 = vector.load %arg4[%c0_14, %c0_15] : memref<1x128xf32, #tpu.memory_space<vmem>>, vector<1x128xf32>
    %35 = vector.broadcast %34 : vector<1x128xf32> to vector<32x128xf32>
    %36 = arith.addf %33, %35 : vector<32x128xf32>
    %cst_16 = arith.constant 0.000000e+00 : f32
    %37 = vector.broadcast %cst_16 : f32 to vector<32x128xf32>
    %38 = arith.maximumf %36, %37 : vector<32x128xf32>
    %39 = vector.extract_strided_slice %38 {offsets = [0, 0], sizes = [24, 128], strides = [1, 1]} : vector<32x128xf32> to vector<24x128xf32>
    %40 = vector.extract_strided_slice %38 {offsets = [1, 0], sizes = [24, 128], strides = [1, 1]} : vector<32x128xf32> to vector<24x128xf32>
    %41 = vector.extract_strided_slice %38 {offsets = [2, 0], sizes = [24, 128], strides = [1, 1]} : vector<32x128xf32> to vector<24x128xf32>
    %42 = tpu.concatenate %39, %40, %41 in 1 : vector<24x128xf32>, vector<24x128xf32>, vector<24x128xf32> -> vector<24x384xf32>
    %c0_17 = arith.constant 0 : index
    %c0_18 = arith.constant 0 : index
    %43 = vector.load %arg5[%c0_17, %c0_18] : memref<384x128xf32, #tpu.memory_space<vmem>>, vector<384x128xf32>
    %cst_19 = arith.constant dense<0.000000e+00> : vector<24x128xf32>
    %44 = tpu.matmul %42, %43, %cst_19 {dimension_numbers = #tpu.dot_dimension_numbers<[1], [0], [0], [1], [0, 0, 1, 1], [], []>} : vector<24x384xf32>, vector<384x128xf32>, vector<24x128xf32> -> vector<24x128xf32>
    %c0_20 = arith.constant 0 : index
    %c0_21 = arith.constant 0 : index
    %45 = vector.load %arg6[%c0_20, %c0_21] : memref<1x128xf32, #tpu.memory_space<vmem>>, vector<1x128xf32>
    %46 = vector.broadcast %45 : vector<1x128xf32> to vector<24x128xf32>
    %47 = arith.addf %44, %46 : vector<24x128xf32>
    %cst_22 = arith.constant 0.000000e+00 : f32
    %48 = vector.broadcast %cst_22 : f32 to vector<24x128xf32>
    %49 = arith.maximumf %47, %48 : vector<24x128xf32>
    %50 = vector.extract_strided_slice %49 {offsets = [0, 0], sizes = [16, 128], strides = [1, 1]} : vector<24x128xf32> to vector<16x128xf32>
    %51 = vector.extract_strided_slice %49 {offsets = [1, 0], sizes = [16, 128], strides = [1, 1]} : vector<24x128xf32> to vector<16x128xf32>
    %52 = vector.extract_strided_slice %49 {offsets = [2, 0], sizes = [16, 128], strides = [1, 1]} : vector<24x128xf32> to vector<16x128xf32>
    %53 = tpu.concatenate %50, %51, %52 in 1 : vector<16x128xf32>, vector<16x128xf32>, vector<16x128xf32> -> vector<16x384xf32>
    %c0_23 = arith.constant 0 : index
    %c0_24 = arith.constant 0 : index
    %54 = vector.load %arg7[%c0_23, %c0_24] : memref<384x128xf32, #tpu.memory_space<vmem>>, vector<384x128xf32>
    %cst_25 = arith.constant dense<0.000000e+00> : vector<16x128xf32>
    %55 = tpu.matmul %53, %54, %cst_25 {dimension_numbers = #tpu.dot_dimension_numbers<[1], [0], [0], [1], [0, 0, 1, 1], [], []>} : vector<16x384xf32>, vector<384x128xf32>, vector<16x128xf32> -> vector<16x128xf32>
    %c0_26 = arith.constant 0 : index
    %c0_27 = arith.constant 0 : index
    %56 = vector.load %arg8[%c0_26, %c0_27] : memref<1x128xf32, #tpu.memory_space<vmem>>, vector<1x128xf32>
    %57 = vector.broadcast %56 : vector<1x128xf32> to vector<16x128xf32>
    %58 = arith.addf %55, %57 : vector<16x128xf32>
    %cst_28 = arith.constant 0.000000e+00 : f32
    %59 = vector.broadcast %cst_28 : f32 to vector<16x128xf32>
    %60 = arith.maximumf %58, %59 : vector<16x128xf32>
    %c0_29 = arith.constant 0 : index
    %c0_30 = arith.constant 0 : index
    %c0_31 = arith.constant 0 : index
    %61 = vector.load %arg9[%c0_29, %c0_30, %c0_31] : memref<1x16x128xf32, #tpu.memory_space<vmem>>, vector<1x16x128xf32>
    %62 = vector.shape_cast %61 : vector<1x16x128xf32> to vector<16x128xf32>
    %63 = vector.shape_cast %60 : vector<16x128xf32> to vector<1x16x128xf32>
    tpu.vector_store %arg9[%c0_29, %c0_30, %c0_31], %63 {strides = array<i32>} : memref<1x16x128xf32, #tpu.memory_space<vmem>>, vector<1x16x128xf32>,
    return
  }
  func.func @transform_1(%arg0: i32, %arg1: i32) -> (i32, i32) {
    %c0_i32 = arith.constant 0 : i32
    %c0_i32_0 = arith.constant 0 : i32
    %c0_i32_1 = arith.constant 0 : i32
    return %c0_i32, %c0_i32_0 : i32, i32
  }
  func.func @transform_2(%arg0: i32, %arg1: i32) -> (i32, i32) {
    %c0_i32 = arith.constant 0 : i32
    %c0_i32_0 = arith.constant 0 : i32
    %c0_i32_1 = arith.constant 0 : i32
    return %c0_i32, %c0_i32_0 : i32, i32
  }
  func.func @transform_3(%arg0: i32, %arg1: i32) -> (i32, i32) {
    %c0_i32 = arith.constant 0 : i32
    %c0_i32_0 = arith.constant 0 : i32
    %c0_i32_1 = arith.constant 0 : i32
    return %c0_i32, %c0_i32_0 : i32, i32
  }
  func.func @transform_4(%arg0: i32, %arg1: i32) -> (i32, i32) {
    %c0_i32 = arith.constant 0 : i32
    %c0_i32_0 = arith.constant 0 : i32
    %c0_i32_1 = arith.constant 0 : i32
    return %c0_i32, %c0_i32_0 : i32, i32
  }
  func.func @transform_5(%arg0: i32, %arg1: i32) -> (i32, i32) {
    %c0_i32 = arith.constant 0 : i32
    %c0_i32_0 = arith.constant 0 : i32
    %c0_i32_1 = arith.constant 0 : i32
    return %c0_i32, %c0_i32_0 : i32, i32
  }
  func.func @transform_6(%arg0: i32, %arg1: i32) -> (i32, i32) {
    %c0_i32 = arith.constant 0 : i32
    %c0_i32_0 = arith.constant 0 : i32
    %c0_i32_1 = arith.constant 0 : i32
    return %c0_i32, %c0_i32_0 : i32, i32
  }
  func.func @transform_7(%arg0: i32, %arg1: i32) -> (i32, i32, i32) {
    %c0_i32 = arith.constant 0 : i32
    %c0_i32_0 = arith.constant 0 : i32
    return %arg0, %arg1, %c0_i32 : i32, i32, i32
  }
}

</mosaic_0001>

<llo_original>
// kernel: tpu_custom_call.1
$region0: #{tpu_custom_call.1}
  #allocation0 [shape = 'u32[]', space=smem, size = 0x4, offset = 0x4, fixed_abs, tag = 'smem constant byte address 0x4 - core index']
  #allocation1 [shape = 'u32[144,128]{1,0:T(1,128)}', space=vmem, size = 0x12000, scoped, tag = 'internal scratch']
  #allocation2 [shape = 'f32[2,40,128]{2,1,0:T(8,128)}', space=vmem, size = 0xa000, scoped, tag = 'scratch operand']
  #allocation3 [shape = 's32[2]{0}', space=sflag, size = 0x8, scoped, tag = 'scratch operand']
  #allocation11 [shape = 's32[]', space=sflag, size = 0x4, offset = 0, fixed_abs, tag = 'sflag constant byte address 0x0 - dummy sync flag']
  #allocation12 [shape = 's32[]', space=sflag, size = 0x4, offset = 0, fixed_abs, tag = 'sflag constant byte address 0x0 - dummy sync flag']
  #allocation13 [shape = 'u32[]', space=smem, size = 0x4, offset = 0x44, fixed_abs, tag = 'smem constant byte address 0x44 - assertion arg 0']
  #allocation14 [shape = 'u32[]', space=smem, size = 0x4, offset = 0x48, fixed_abs, tag = 'smem constant byte address 0x48 - assertion arg 1']
  #allocation15 [shape = 's32[]', space=sflag, size = 0x4, offset = 0, fixed_abs, tag = 'sflag constant byte address 0x0 - dummy sync flag']
  #allocation16 [shape = 's32[]', space=sflag, size = 0x4, offset = 0, fixed_abs, tag = 'sflag constant byte address 0x0 - dummy sync flag']
  %s0 = inlined_call_operand.hbm [shape: f32[2,40,128], index: 0, kind: input, shape index: {}]
  %s1 = inlined_call_operand.hbm [shape: f32[384,128], index: 1, kind: input, shape index: {}]
  %s2 = inlined_call_operand.vmem [shape: f32[1,128], index: 2, kind: input, shape index: {}]
  %s3 = inlined_call_operand.hbm [shape: f32[384,128], index: 3, kind: input, shape index: {}]
  %s4 = inlined_call_operand.vmem [shape: f32[1,128], index: 4, kind: input, shape index: {}]
  %s5 = inlined_call_operand.hbm [shape: f32[384,128], index: 5, kind: input, shape index: {}]
  %s6 = inlined_call_operand.vmem [shape: f32[1,128], index: 6, kind: input, shape index: {}]
  %s7 = inlined_call_operand.hbm [shape: f32[2,16,128], index: 7, kind: output, shape index: {}]
  %s8 = sld [smem:[#allocation0]]
  $region85: #{tpu_custom_call.1} parent=0
    _
  %s10 = ssub.s32 1, %s8
  %s11 = scalar_select 0, %s10, %s8
  $region1: #{tpu_custom_call.1} parent=0
    #allocation4 [shape = 'u8[196608]{0}', space=vmem, size = 0x30000, scoped, tag = 'input window, operand 1, single buffered']
    #allocation5 [shape = 's32[2]{0}', space=sflag, size = 0x8, scoped, tag = 'scoped memory for tpu_custom_call.1']
    #allocation6 [shape = 's32[2]{0}', space=sflag, size = 0x8, scoped, tag = 'scoped memory for tpu_custom_call.1']
    #allocation7 [shape = 'u8[196608]{0}', space=vmem, size = 0x30000, scoped, tag = 'input window, operand 3, single buffered']
    #allocation8 [shape = 's32[1]{0}', space=sflag, size = 0x4, scoped, tag = 'scoped memory for tpu_custom_call.1']
    #allocation9 [shape = 'u8[196608]{0}', space=vmem, size = 0x30000, scoped, tag = 'input window, operand 5, single buffered']
    #allocation10 [shape = 'u8[16384]{0}', space=vmem, size = 0x4000, scoped, tag = 'output window, operand 0']
    %12 = vsyncpa [#allocation5], 0
    %13 = vsyncpa [#allocation8], 0
    %14 = vsyncpa [#allocation6], 0
    %s15 = scalar_lea.sflag [#allocation6], 1
    %16 = vsyncpa %s15, 0
    loop: start=0, step=1, limit=4
    $region2: #{tpu_custom_call.1} parent=1 // loop_pre_header
      _
    $region3: #{tpu_custom_call.1} parent=1 // loop_header
      %s18 = sphi 0, %s22
      %p19 = scmp.ge.s32.totalorder %s18, 4
      %s25 = sphi 0, %s37
      %s26 = sphi 0, %s33
      %s27 = sphi 0, %s25
      %s28 = sphi 0, %s26
      %s29 = sphi 0, %s27
      %s30 = sphi 0, %s28
      %s38 = sphi 0, %s38
      %s40 = sphi 0, %s38
      %s41 = sphi 0, %s40
      %s55 = sphi 0, %s41
      %s59 = sphi 0, %s59
      %s61 = sphi 0, %s59
      %s62 = sphi 0, %s61
      %s76 = sphi 0, %s62
      %s80 = sphi 0, %s80
      %s82 = sphi 0, %s80
      %s83 = sphi 0, %s82
      %s97 = sphi 0, %s83
      %s101 = sphi 0, %s101
      %s103 = sphi 0, %s101
      %s104 = sphi 0, %s103
      %s118 = sphi 0, %s104
      %s122 = sphi 0, %s122
      %s124 = sphi 0, %s122
      %s125 = sphi 0, %s124
      %s139 = sphi 0, %s125
      %s143 = sphi 0, %s143
      %s145 = sphi 0, %s143
      %s146 = sphi 0, %s145
      %s160 = sphi 0, %s146
      %s168 = sphi 0, %s170
      %s171 = sphi 0, %s168
      %s172 = sphi 0, %s171
      %s188 = sphi 0, %s172
    $region4: #{tpu_custom_call.1} parent=1 // loop_header_branch
      %21 = sbr.rel (%p19) target = $region8
    $region5: #{tpu_custom_call.1} parent=1 // loop_body
      %s23 = ssub.s32 %s18, 1
      %s24 = ssub.s32 %s18, 2
      %s31 = sadd.s32 1, %s26
      %p32 = scmp.ge.s32.totalorder %s31, 1
      %s33 = scalar_select %p32, 0, %s31
      %s34 = sadd.s32 1, %s25
      %s35 = scalar_select %p32, %s34, %s25
      %p36 = scmp.ge.s32.totalorder %s35, 2
      %s37 = scalar_select %p36, 0, %s35
      %s39 = sadd.s32 %s38, 1
      %p42 = scmp.eq.s32.totalorder %s18, 1
      %p43 = scmp.ne.s32.totalorder %s38, %s40
      %p44 = scmp.eq.s32.totalorder %s18, 0
      %p45 = por %p43, %p44
      %p46 = scmp.ne.s32.totalorder %s38, %s40
      %p47 = scmp.eq.s32.totalorder %s23, 1
      %p48 = por %p46, %p47
      %p49 = scmp.ne.s32.totalorder %s40, %s41
      %p50 = scmp.eq.s32.totalorder %s23, 0
      %p51 = por %p49, %p50
      %p52 = scmp.ne.s32.totalorder %s40, %s41
      %p53 = scmp.eq.s32.totalorder %s24, 1
      %p54 = por %p52, %p53
      %p56 = scmp.ne.s32.totalorder %s41, %s55
      %p57 = scmp.eq.s32.totalorder %s24, 0
      %p58 = por %p56, %p57
      %s60 = sadd.s32 %s59, 1
      %p63 = scmp.eq.s32.totalorder %s18, 1
      %p64 = scmp.ne.s32.totalorder %s59, %s61
      %p65 = scmp.eq.s32.totalorder %s18, 0
      %p66 = por %p64, %p65
      %p67 = scmp.ne.s32.totalorder %s59, %s61
      %p68 = scmp.eq.s32.totalorder %s23, 1
      %p69 = por %p67, %p68
      %p70 = scmp.ne.s32.totalorder %s61, %s62
      %p71 = scmp.eq.s32.totalorder %s23, 0
      %p72 = por %p70, %p71
      %p73 = scmp.ne.s32.totalorder %s61, %s62
      %p74 = scmp.eq.s32.totalorder %s24, 1
      %p75 = por %p73, %p74
      %p77 = scmp.ne.s32.totalorder %s62, %s76
      %p78 = scmp.eq.s32.totalorder %s24, 0
      %p79 = por %p77, %p78
      %s81 = sadd.s32 %s80, 1
      %p84 = scmp.eq.s32.totalorder %s18, 1
      %p85 = scmp.ne.s32.totalorder %s80, %s82
      %p86 = scmp.eq.s32.totalorder %s18, 0
      %p87 = por %p85, %p86
      %p88 = scmp.ne.s32.totalorder %s80, %s82
      %p89 = scmp.eq.s32.totalorder %s23, 1
      %p90 = por %p88, %p89
      %p91 = scmp.ne.s32.totalorder %s82, %s83
      %p92 = scmp.eq.s32.totalorder %s23, 0
      %p93 = por %p91, %p92
      %p94 = scmp.ne.s32.totalorder %s82, %s83
      %p95 = scmp.eq.s32.totalorder %s24, 1
      %p96 = por %p94, %p95
      %p98 = scmp.ne.s32.totalorder %s83, %s97
      %p99 = scmp.eq.s32.totalorder %s24, 0
      %p100 = por %p98, %p99
      %s102 = sadd.s32 %s101, 1
      %p105 = scmp.eq.s32.totalorder %s18, 1
      %p106 = scmp.ne.s32.totalorder %s101, %s103
      %p107 = scmp.eq.s32.totalorder %s18, 0
      %p108 = por %p106, %p107
      %p109 = scmp.ne.s32.totalorder %s101, %s103
      %p110 = scmp.eq.s32.totalorder %s23, 1
      %p111 = por %p109, %p110
      %p112 = scmp.ne.s32.totalorder %s103, %s104
      %p113 = scmp.eq.s32.totalorder %s23, 0
      %p114 = por %p112, %p113
      %p115 = scmp.ne.s32.totalorder %s103, %s104
      %p116 = scmp.eq.s32.totalorder %s24, 1
      %p117 = por %p115, %p116
      %p119 = scmp.ne.s32.totalorder %s104, %s118
      %p120 = scmp.eq.s32.totalorder %s24, 0
      %p121 = por %p119, %p120
      %s123 = sadd.s32 %s122, 1
      %p126 = scmp.eq.s32.totalorder %s18, 1
      %p127 = scmp.ne.s32.totalorder %s122, %s124
      %p128 = scmp.eq.s32.totalorder %s18, 0
      %p129 = por %p127, %p128
      %p130 = scmp.ne.s32.totalorder %s122, %s124
      %p131 = scmp.eq.s32.totalorder %s23, 1
      %p132 = por %p130, %p131
      %p133 = scmp.ne.s32.totalorder %s124, %s125
      %p134 = scmp.eq.s32.totalorder %s23, 0
      %p135 = por %p133, %p134
      %p136 = scmp.ne.s32.totalorder %s124, %s125
      %p137 = scmp.eq.s32.totalorder %s24, 1
      %p138 = por %p136, %p137
      %p140 = scmp.ne.s32.totalorder %s125, %s139
      %p141 = scmp.eq.s32.totalorder %s24, 0
      %p142 = por %p140, %p141
      %s144 = sadd.s32 %s143, 1
      %p147 = scmp.eq.s32.totalorder %s18, 1
      %p148 = scmp.ne.s32.totalorder %s143, %s145
      %p149 = scmp.eq.s32.totalorder %s18, 0
      %p150 = por %p148, %p149
      %p151 = scmp.ne.s32.totalorder %s143, %s145
      %p152 = scmp.eq.s32.totalorder %s23, 1
      %p153 = por %p151, %p152
      %p154 = scmp.ne.s32.totalorder %s145, %s146
      %p155 = scmp.eq.s32.totalorder %s23, 0
      %p156 = por %p154, %p155
      %p157 = scmp.ne.s32.totalorder %s145, %s146
      %p158 = scmp.eq.s32.totalorder %s24, 1
      %p159 = por %p157, %p158
      %p161 = scmp.ne.s32.totalorder %s146, %s160
      %p162 = scmp.eq.s32.totalorder %s24, 0
      %p163 = por %p161, %p162
      %s164 = ssub.s32 %s25, %s37
      %s165 = ssub.s32 %s26, %s33
      %s166 = sor.u32 %s164, %s165
      %p167 = scmp.eq.s32.totalorder %s166, 0
      %s169 = sadd.s32 %s168, 1
      %s170 = scalar_select %p167, %s168, %s169
      %p173 = pneg %p167
      %p174 = scmp.eq.s32.totalorder %s18, 1
      %p175 = por %p173, %p174
      %p176 = scmp.ne.s32.totalorder %s168, %s171
      %p177 = scmp.eq.s32.totalorder %s18, 0
      %p178 = por %p176, %p177
      %p179 = scmp.ne.s32.totalorder %s168, %s171
      %p180 = scmp.eq.s32.totalorder %s23, 1
      %p181 = por %p179, %p180
      %p182 = scmp.ne.s32.totalorder %s171, %s172
      %p183 = scmp.eq.s32.totalorder %s23, 0
      %p184 = por %p182, %p183
      %p185 = scmp.ne.s32.totalorder %s171, %s172
      %p186 = scmp.eq.s32.totalorder %s24, 1
      %p187 = por %p185, %p186
      %p189 = scmp.ne.s32.totalorder %s172, %s188
      %p190 = scmp.eq.s32.totalorder %s24, 0
      %p191 = por %p189, %p190
      %p192 = scmp.le.s32.totalorder 1, %s18
      %p193 = scmp.lt.s32.totalorder %s18, 3
      %p194 = pnand %p192, %p193
      %p195 = pneg %p194
      // Predicated region
      $region9: #{tpu_custom_call.1} parent=5 // pred_check
        _
      $region10: #{tpu_custom_call.1} parent=5 // pred_check_branch
        %197 = sbr.rel (%p194) target = $region12
      $region11: #{tpu_custom_call.1} parent=5 // pred_region
        %s198 = ssub.s32 %s18, 1
        // Predicated region
        $region13: #{tpu_custom_call.1} parent=11 // pred_check
          %p199 = pneg %p51
        $region14: #{tpu_custom_call.1} parent=11 // pred_check_branch
          %201 = sbr.rel (%p199) target = $region16
        $region15: #{tpu_custom_call.1} parent=11 // pred_region
          %s203 = ssub.s32 6144, 6144
          %204 = vsyncadd [#allocation5], %s203
          %s205 = sshll.u32 [#allocation4], 4
          %s206 = int_to_ptr.vmem [resolvable:$true] %s205
          %211 = dma.hbm_to_vmem [thread:$0]  %s1, 6144, %s206, [#allocation5], 128, 128, 8
        $region16: #{tpu_custom_call.1} parent=11 // pred_fallthru
          _
        // Predicated region
        $region17: #{tpu_custom_call.1} parent=11 // pred_check
          %p212 = pneg %p72
        $region18: #{tpu_custom_call.1} parent=11 // pred_check_branch
          %214 = sbr.rel (%p212) target = $region20
        $region19: #{tpu_custom_call.1} parent=11 // pred_region
          _
        $region20: #{tpu_custom_call.1} parent=11 // pred_fallthru
          _
        // Predicated region
        $region21: #{tpu_custom_call.1} parent=11 // pred_check
          %p215 = pneg %p93
        $region22: #{tpu_custom_call.1} parent=11 // pred_check_branch
          %217 = sbr.rel (%p215) target = $region24
        $region23: #{tpu_custom_call.1} parent=11 // pred_region
          %s219 = ssub.s32 6144, 6144
          %220 = vsyncadd [#allocation8], %s219
          %s221 = sshll.u32 [#allocation7], 4
          %s222 = int_to_ptr.vmem [resolvable:$true] %s221
          %227 = dma.hbm_to_vmem [thread:$0]  %s3, 6144, %s222, [#allocation8], 128, 128, 8
        $region24: #{tpu_custom_call.1} parent=11 // pred_fallthru
          _
        // Predicated region
        $region25: #{tpu_custom_call.1} parent=11 // pred_check
          %p228 = pneg %p114
        $region26: #{tpu_custom_call.1} parent=11 // pred_check_branch
          %230 = sbr.rel (%p228) target = $region28
        $region27: #{tpu_custom_call.1} parent=11 // pred_region
          _
        $region28: #{tpu_custom_call.1} parent=11 // pred_fallthru
          _
        // Predicated region
        $region29: #{tpu_custom_call.1} parent=11 // pred_check
          %p231 = pneg %p135
        $region30: #{tpu_custom_call.1} parent=11 // pred_check_branch
          %233 = sbr.rel (%p231) target = $region32
        $region31: #{tpu_custom_call.1} parent=11 // pred_region
          %s235 = ssub.s32 6144, 6144
          %236 = vsyncadd [#allocation8], %s235
          %s237 = sshll.u32 [#allocation9], 4
          %s238 = int_to_ptr.vmem [resolvable:$true] %s237
          %243 = dma.hbm_to_vmem [thread:$0]  %s5, 6144, %s238, [#allocation8], 128, 128, 8
        $region32: #{tpu_custom_call.1} parent=11 // pred_fallthru
          _
        // Predicated region
        $region33: #{tpu_custom_call.1} parent=11 // pred_check
          %p244 = pneg %p156
        $region34: #{tpu_custom_call.1} parent=11 // pred_check_branch
          %246 = sbr.rel (%p244) target = $region36
        $region35: #{tpu_custom_call.1} parent=11 // pred_region
          _
        $region36: #{tpu_custom_call.1} parent=11 // pred_fallthru
          _
      $region12: #{tpu_custom_call.1} parent=5 // pred_fallthru
        _
      %p247 = scmp.lt.s32.totalorder %s18, 2
      // Predicated region
      $region37: #{tpu_custom_call.1} parent=5 // pred_check
        %p248 = pneg %p247
      $region38: #{tpu_custom_call.1} parent=5 // pred_check_branch
        %250 = sbr.rel (%p248) target = $region40
      $region39: #{tpu_custom_call.1} parent=5 // pred_region
        _
      $region40: #{tpu_custom_call.1} parent=5 // pred_fallthru
        _
      %p251 = scmp.le.s32.totalorder 1, %s18
      %p252 = scmp.lt.s32.totalorder %s18, 3
      %p253 = pnand %p251, %p252
      %p254 = pneg %p253
      // Predicated region
      $region41: #{tpu_custom_call.1} parent=5 // pred_check
        _
      $region42: #{tpu_custom_call.1} parent=5 // pred_check_branch
        %256 = sbr.rel (%p253) target = $region44
      $region43: #{tpu_custom_call.1} parent=5 // pred_region
        %s257 = ssub.s32 %s18, 1
        // Predicated region
        $region45: #{tpu_custom_call.1} parent=43 // pred_check
          %p258 = pneg %p51
        $region46: #{tpu_custom_call.1} parent=43 // pred_check_branch
          %260 = sbr.rel (%p258) target = $region48
        $region47: #{tpu_custom_call.1} parent=43 // pred_region
          %261 = dma.done [#allocation5], 6144
        $region48: #{tpu_custom_call.1} parent=43 // pred_fallthru
          _
        // Predicated region
        $region49: #{tpu_custom_call.1} parent=43 // pred_check
          %p262 = pneg %p93
        $region50: #{tpu_custom_call.1} parent=43 // pred_check_branch
          %264 = sbr.rel (%p262) target = $region52
        $region51: #{tpu_custom_call.1} parent=43 // pred_region
          %265 = dma.done [#allocation8], 6144
        $region52: #{tpu_custom_call.1} parent=43 // pred_fallthru
          _
        // Predicated region
        $region53: #{tpu_custom_call.1} parent=43 // pred_check
          %p266 = pneg %p135
        $region54: #{tpu_custom_call.1} parent=43 // pred_check_branch
          %268 = sbr.rel (%p266) target = $region56
        $region55: #{tpu_custom_call.1} parent=43 // pred_region
          %269 = dma.done [#allocation8], 6144
        $region56: #{tpu_custom_call.1} parent=43 // pred_fallthru
          _
        %p270 = pneg %p51
        %p271 = pneg %p48
        %p272 = pneg %p72
        %p273 = pneg %p69
        %p274 = pneg %p93
        %p275 = pneg %p90
        %p276 = pneg %p114
        %p277 = pneg %p111
        %p278 = pneg %p135
        %p279 = pneg %p132
        %p280 = pneg %p156
        %p281 = pneg %p153
        %p282 = pneg %p184
        %p283 = pneg %p181
        %s284 = sand.u32 %s171, 1
        %s285 = scalar_lea.sflag [#allocation6], %s284
        %s286 = sand.u32 %s171, 1
        %s287 = smul.addr %s286, 16
        %s288 = scalar_lea.vmem [#allocation10], %s287
        %s289 = smul.u32 2, %s28
        %p290 = scmp.lt.s32.totalorder %s28, 0
        %s291 = ssub.s32 0, %s28
        %s292 = scalar_select %p290, %s291, %s28
        %s293 = sand.u32 %s292, 1
        %s294 = ssub.s32 0, %s293
        %s295 = scalar_select %p290, %s294, %s293
        %p296 = scmp.ne.s32.totalorder %s295, 0
        %p297 = scmp.lt.s32.totalorder %s295, 0
        %p298 = pnand %p297, %p296
        %p299 = pneg %p298
        %s300 = sadd.s32 %s295, 2
        %s301 = scalar_select %p299, %s300, %s295
        %p302 = scmp.eq.s32.totalorder %s28, 0
        // Predicated region
        $region57: #{tpu_custom_call.1} parent=43 // pred_check
          %p303 = pneg %p302
        $region58: #{tpu_custom_call.1} parent=43 // pred_check_branch
          %305 = sbr.rel (%p303) target = $region60
        $region59: #{tpu_custom_call.1} parent=43 // pred_region
          %s306 = smul.u32 %s28, 16
          %s307 = smul.u32 %s27, 40
          %s308 = sadd.s32 %s306, %s307
          %s309 = smul.addr %s308, 16
          %s310 = scalar_lea.hbm %s0, %s309
          // Predicated region
          $region61: #{tpu_custom_call.1} parent=59 // pred_check
            _
          $region62: #{tpu_custom_call.1} parent=59 // pred_check_branch
            %312 = sbr.rel target = $region64
          $region63: #{tpu_custom_call.1} parent=59 // pred_region
            %313 = sst [smem:[#allocation13]] [#allocation12]
            %314 = sst [smem:[#allocation14]] [#allocation11]
          $region64: #{tpu_custom_call.1} parent=59 // pred_fallthru
            _
          %316 = shalt.err (0)
          %s318 = sshll.u32 [#allocation2], 4
          %s319 = int_to_ptr.vmem [resolvable:$true] %s318
          %321 = dma.hbm_to_vmem [thread:$0]  %s310, 640, %s319, [#allocation3]
        $region60: #{tpu_custom_call.1} parent=43 // pred_fallthru
          _
        %s322 = sadd.s32 %s28, 1
        %p323 = scmp.lt.s32.totalorder %s322, 1
        // Predicated region
        $region65: #{tpu_custom_call.1} parent=43 // pred_check
          %p324 = pneg %p323
        $region66: #{tpu_custom_call.1} parent=43 // pred_check_branch
          %326 = sbr.rel (%p324) target = $region68
        $region67: #{tpu_custom_call.1} parent=43 // pred_region
          %s327 = ssub.s32 1, %s301
          %s328 = smul.u32 %s322, 16
          %s329 = smul.u32 %s27, 40
          %s330 = sadd.s32 %s328, %s329
          %s331 = smul.addr %s330, 16
          %s332 = scalar_lea.hbm %s0, %s331
          %s333 = smul.u32 %s327, 40
          %s334 = scalar_lea.vmem [#allocation2], %s333
          %s335 = scalar_lea.sflag [#allocation3], %s327
          // Predicated region
          $region69: #{tpu_custom_call.1} parent=67 // pred_check
            _
          $region70: #{tpu_custom_call.1} parent=67 // pred_check_branch
            %337 = sbr.rel target = $region72
          $region71: #{tpu_custom_call.1} parent=67 // pred_region
            %338 = sst [smem:[#allocation13]] [#allocation16]
            %339 = sst [smem:[#allocation14]] [#allocation15]
          $region72: #{tpu_custom_call.1} parent=67 // pred_fallthru
            _
          %341 = shalt.err (0)
          %s343 = sshll.u32 %s334, 4
          %s344 = int_to_ptr.vmem [resolvable:$true] %s343
          %346 = dma.hbm_to_vmem [thread:$0]  %s332, 640, %s344, %s335
        $region68: #{tpu_custom_call.1} parent=43 // pred_fallthru
          _
        %s347 = smul.u32 %s28, 16
        %s348 = smul.u32 %s301, 40
        %s349 = scalar_lea.vmem [#allocation2], %s348
        %s350 = scalar_lea.sflag [#allocation3], %s301
        %s351 = smul.u32 40, 1
        %s352 = sshll.u32 %s351, 4
        %353 = dma.done %s350, %s352
        %v354 = vld [vmem:[%s349] sm:$0xff]
        %v355 = vld [vmem:[%s349 + $0x8] sm:$0xff]
        %v356 = vld [vmem:[%s349 + $0x10] sm:$0xff]
        %v357 = vld [vmem:[%s349 + $0x18] sm:$0xff]
        %v358 = vld [vmem:[%s349 + $0x20] sm:$0xff]
        %vm364 = vcmask 1046528
        %v365 = vrot.slane %v354, 1
        %v366 = vrot.slane %v355, 1
        %v367 = vsel %vm364, %v365, %v366
        %v368 = vrot.slane %v356, 1
        %v369 = vsel %vm364, %v366, %v368
        %v370 = vrot.slane %v357, 1
        %v371 = vsel %vm364, %v368, %v370
        %v372 = vrot.slane %v358, 1
        %v373 = vsel %vm364, %v370, %v372
        %vm378 = vcmask 1045504
        %v379 = vrot.slane %v354, 2
        %v380 = vrot.slane %v355, 2
        %v381 = vsel %vm378, %v379, %v380
        %v382 = vrot.slane %v356, 2
        %v383 = vsel %vm378, %v380, %v382
        %v384 = vrot.slane %v357, 2
        %v385 = vsel %vm378, %v382, %v384
        %v386 = vrot.slane %v358, 2
        %v387 = vsel %vm378, %v384, %v386
        %v392 = vld [vmem:[#allocation4] sm:$0xff]
        %v393 = vld [vmem:[#allocation4 + $0x8] sm:$0xff]
        %v394 = vld [vmem:[#allocation4 + $0x10] sm:$0xff]
        %v395 = vld [vmem:[#allocation4 + $0x18] sm:$0xff]
        %v396 = vld [vmem:[#allocation4 + $0x20] sm:$0xff]
        %v397 = vld [vmem:[#allocation4 + $0x28] sm:$0xff]
        %v398 = vld [vmem:[#allocation4 + $0x30] sm:$0xff]
        %v399 = vld [vmem:[#allocation4 + $0x38] sm:$0xff]
        %v400 = vld [vmem:[#allocation4 + $0x40] sm:$0xff]
        %v401 = vld [vmem:[#allocation4 + $0x48] sm:$0xff]
        %v402 = vld [vmem:[#allocation4 + $0x50] sm:$0xff]
        %v403 = vld [vmem:[#allocation4 + $0x58] sm:$0xff]
        %v404 = vld [vmem:[#allocation4 + $0x60] sm:$0xff]
        %v405 = vld [vmem:[#allocation4 + $0x68] sm:$0xff]
        %v406 = vld [vmem:[#allocation4 + $0x70] sm:$0xff]
        %v407 = vld [vmem:[#allocation4 + $0x78] sm:$0xff]
        %v408 = vld [vmem:[#allocation4 + $0x80] sm:$0xff]
        %v409 = vld [vmem:[#allocation4 + $0x88] sm:$0xff]
        %v410 = vld [vmem:[#allocation4 + $0x90] sm:$0xff]
        %v411 = vld [vmem:[#allocation4 + $0x98] sm:$0xff]
        %v412 = vld [vmem:[#allocation4 + $0xa0] sm:$0xff]
        %v413 = vld [vmem:[#allocation4 + $0xa8] sm:$0xff]
        %v414 = vld [vmem:[#allocation4 + $0xb0] sm:$0xff]
        %v415 = vld [vmem:[#allocation4 + $0xb8] sm:$0xff]
        %v416 = vld [vmem:[#allocation4 + $0xc0] sm:$0xff]
        %v417 = vld [vmem:[#allocation4 + $0xc8] sm:$0xff]
        %v418 = vld [vmem:[#allocation4 + $0xd0] sm:$0xff]
        %v419 = vld [vmem:[#allocation4 + $0xd8] sm:$0xff]
        %v420 = vld [vmem:[#allocation4 + $0xe0] sm:$0xff]
        %v421 = vld [vmem:[#allocation4 + $0xe8] sm:$0xff]
        %v422 = vld [vmem:[#allocation4 + $0xf0] sm:$0xff]
        %v423 = vld [vmem:[#allocation4 + $0xf8] sm:$0xff]
        %v424 = vld [vmem:[#allocation4 + $0x100] sm:$0xff]
        %v425 = vld [vmem:[#allocation4 + $0x108] sm:$0xff]
        %v426 = vld [vmem:[#allocation4 + $0x110] sm:$0xff]
        %v427 = vld [vmem:[#allocation4 + $0x118] sm:$0xff]
        %v428 = vld [vmem:[#allocation4 + $0x120] sm:$0xff]
        %v429 = vld [vmem:[#allocation4 + $0x128] sm:$0xff]
        %v430 = vld [vmem:[#allocation4 + $0x130] sm:$0xff]
        %v431 = vld [vmem:[#allocation4 + $0x138] sm:$0xff]
        %v432 = vld [vmem:[#allocation4 + $0x140] sm:$0xff]
        %v433 = vld [vmem:[#allocation4 + $0x148] sm:$0xff]
        %v434 = vld [vmem:[#allocation4 + $0x150] sm:$0xff]
        %v435 = vld [vmem:[#allocation4 + $0x158] sm:$0xff]
        %v436 = vld [vmem:[#allocation4 + $0x160] sm:$0xff]
        %v437 = vld [vmem:[#allocation4 + $0x168] sm:$0xff]
        %v438 = vld [vmem:[#allocation4 + $0x170] sm:$0xff]
        %v439 = vld [vmem:[#allocation4 + $0x178] sm:$0xff]
        %v440 = vld [vmem:[%s2] sm:$0x1]
        %v442 = vlaneseq
        %v443 = vshrl.u32 %v442, 7
        %v444 = vsub.s32 0, %v443
        %v445 = vrot.slane %v440, %v444
        %447 = vmatprep.subr.mxu0 0.0
        %448 = vmatpush1.msra.mxu0 %v392
        %449 = vmatprep.subr.mxu0 0.0
        %450 = vmatpush1.msra.mxu0 %v393
        %451 = vmatprep.subr.mxu0 0.0
        %452 = vmatpush1.msra.mxu0 %v394
        %453 = vmatprep.subr.mxu0 0.0
        %454 = vmatpush1.msra.mxu0 %v395
        %455 = vmatprep.subr.mxu0 0.0
        %456 = vmatpush1.msra.mxu0 %v396
        %457 = vmatprep.subr.mxu0 0.0
        %458 = vmatpush1.msra.mxu0 %v397
        %459 = vmatprep.subr.mxu0 0.0
        %460 = vmatpush1.msra.mxu0 %v398
        %461 = vmatprep.subr.mxu0 0.0
        %462 = vmatpush1.msra.mxu0 %v399
        %463 = vmatprep.subr.mxu0 0.0
        %464 = vmatpush1.msra.mxu0 %v400
        %465 = vmatprep.subr.mxu0 0.0
        %466 = vmatpush1.msra.mxu0 %v401
        %467 = vmatprep.subr.mxu0 0.0
        %468 = vmatpush1.msra.mxu0 %v402
        %469 = vmatprep.subr.mxu0 0.0
        %470 = vmatpush1.msra.mxu0 %v403
        %471 = vmatprep.subr.mxu0 0.0
        %472 = vmatpush1.msra.mxu0 %v404
        %473 = vmatprep.subr.mxu0 0.0
        %474 = vmatpush1.msra.mxu0 %v405
        %475 = vmatprep.subr.mxu0 0.0
        %476 = vmatpush1.msra.mxu0 %v406
        %477 = vmatprep.subr.mxu0 0.0
        %478 = vmatpush1.msra.mxu0 %v407
        %479 = vmatprep.subr.mxu0 0.0
        %480 = vmatpush1.msra.mxu0 %v408
        %481 = vmatprep.subr.mxu0 0.0
        %482 = vmatpush1.msra.mxu0 %v409
        %483 = vmatprep.subr.mxu0 0.0
        %484 = vmatpush1.msra.mxu0 %v410
        %485 = vmatprep.subr.mxu0 0.0
        %486 = vmatpush1.msra.mxu0 %v411
        %487 = vmatprep.subr.mxu0 0.0
        %488 = vmatpush1.msra.mxu0 %v412
        %489 = vmatprep.subr.mxu0 0.0
        %490 = vmatpush1.msra.mxu0 %v413
        %491 = vmatprep.subr.mxu0 0.0
        %492 = vmatpush1.msra.mxu0 %v414
        %493 = vmatprep.subr.mxu0 0.0
        %494 = vmatpush1.msra.mxu0 %v415
        %495 = vmatprep.subr.mxu0 0.0
        %496 = vmatpush1.msra.mxu0 %v416
        %497 = vmatprep.subr.mxu0 0.0
        %498 = vmatpush1.msra.mxu0 %v417
        %499 = vmatprep.subr.mxu0 0.0
        %500 = vmatpush1.msra.mxu0 %v418
        %501 = vmatprep.subr.mxu0 0.0
        %502 = vmatpush1.msra.mxu0 %v419
        %503 = vmatprep.subr.mxu0 0.0
        %504 = vmatpush1.msra.mxu0 %v420
        %505 = vmatprep.subr.mxu0 0.0
        %506 = vmatpush1.msra.mxu0 %v421
        %507 = vmatprep.subr.mxu0 0.0
        %508 = vmatpush1.msra.mxu0 %v422
        %509 = vmatprep.subr.mxu0 0.0
        %510 = vmatpush1.msra.mxu0 %v423
        %511 = vmatprep.mubr.f32.mxu0 %v367
        %512 = vmatmul.mubr.f32.gmra.mrb[0].mxu0 %v354
        %v513 = vpop.f32.mrb[0].mxu0
        %v514 = vadd.f32 %v445, %v513
        %v515 = vpop.f32.mrb[0].mxu0
        %516 = vmatprep.mubr.f32.mxu0 %v369
        %517 = vmatmul.mubr.f32.gmra.mrb[0].mxu0 %v355
        %v518 = vpop.f32.mrb[0].mxu0
        %v519 = vadd.f32 %v445, %v518
        %v520 = vpop.f32.mrb[0].mxu0
        %521 = vmatprep.mubr.f32.mxu0 %v371
        %522 = vmatmul.mubr.f32.gmra.mrb[0].mxu0 %v356
        %v523 = vpop.f32.mrb[0].mxu0
        %v524 = vadd.f32 %v445, %v523
        %v525 = vpop.f32.mrb[0].mxu0
        %526 = vmatprep.mubr.f32.mxu0 %v373
        %527 = vmatmul.mubr.f32.gmra.mrb[0].mxu0 %v357
        %v528 = vpop.f32.mrb[0].mxu0
        %v529 = vadd.f32 %v445, %v528
        %v530 = vpop.f32.mrb[0].mxu0
        %531 = vdwg.mxu0
        %532 = vmatprep.subr.mxu0 0.0
        %533 = vmatpush1.msra.mxu0 %v424
        %534 = vmatprep.subr.mxu0 0.0
        %535 = vmatpush1.msra.mxu0 %v425
        %536 = vmatprep.subr.mxu0 0.0
        %537 = vmatpush1.msra.mxu0 %v426
        %538 = vmatprep.subr.mxu0 0.0
        %539 = vmatpush1.msra.mxu0 %v427
        %540 = vmatprep.subr.mxu0 0.0
        %541 = vmatpush1.msra.mxu0 %v428
        %542 = vmatprep.subr.mxu0 0.0
        %543 = vmatpush1.msra.mxu0 %v429
        %544 = vmatprep.subr.mxu0 0.0
        %545 = vmatpush1.msra.mxu0 %v430
        %546 = vmatprep.subr.mxu0 0.0
        %547 = vmatpush1.msra.mxu0 %v431
        %548 = vmatprep.subr.mxu0 0.0
        %549 = vmatpush1.msra.mxu0 %v432
        %550 = vmatprep.subr.mxu0 0.0
        %551 = vmatpush1.msra.mxu0 %v433
        %552 = vmatprep.subr.mxu0 0.0
        %553 = vmatpush1.msra.mxu0 %v434
        %554 = vmatprep.subr.mxu0 0.0
        %555 = vmatpush1.msra.mxu0 %v435
        %556 = vmatprep.subr.mxu0 0.0
        %557 = vmatpush1.msra.mxu0 %v436
        %558 = vmatprep.subr.mxu0 0.0
        %559 = vmatpush1.msra.mxu0 %v437
        %560 = vmatprep.subr.mxu0 0.0
        %561 = vmatpush1.msra.mxu0 %v438
        %562 = vmatprep.subr.mxu0 0.0
        %563 = vmatpush1.msra.mxu0 %v439
        %564 = vmatprep.subr.mxu0 0.0
        %565 = vmatpush1.msra.mxu0 0.0
        %566 = vmatprep.subr.mxu0 0.0
        %567 = vmatpush1.msra.mxu0 0.0
        %568 = vmatprep.subr.mxu0 0.0
        %569 = vmatpush1.msra.mxu0 0.0
        %570 = vmatprep.subr.mxu0 0.0
        %571 = vmatpush1.msra.mxu0 0.0
        %572 = vmatprep.subr.mxu0 0.0
        %573 = vmatpush1.msra.mxu0 0.0
        %574 = vmatprep.subr.mxu0 0.0
        %575 = vmatpush1.msra.mxu0 0.0
        %576 = vmatprep.subr.mxu0 0.0
        %577 = vmatpush1.msra.mxu0 0.0
        %578 = vmatprep.subr.mxu0 0.0
        %579 = vmatpush1.msra.mxu0 0.0
        %580 = vmatprep.subr.mxu0 0.0
        %581 = vmatpush1.msra.mxu0 0.0
        %582 = vmatprep.subr.mxu0 0.0
        %583 = vmatpush1.msra.mxu0 0.0
        %584 = vmatprep.subr.mxu0 0.0
        %585 = vmatpush1.msra.mxu0 0.0
        %586 = vmatprep.subr.mxu0 0.0
        %587 = vmatpush1.msra.mxu0 0.0
        %588 = vmatprep.subr.mxu0 0.0
        %589 = vmatpush1.msra.mxu0 0.0
        %590 = vmatprep.subr.mxu0 0.0
        %591 = vmatpush1.msra.mxu0 0.0
        %592 = vmatprep.subr.mxu0 0.0
        %593 = vmatpush1.msra.mxu0 0.0
        %594 = vmatprep.subr.mxu0 0.0
        %595 = vmatpush1.msra.mxu0 0.0
        %596 = vmatprep.mubr.f32.mxu0 0.0
        %597 = vmatmul.mubr.f32.gmra.mrb[0].mxu0 %v381
        %v598 = vpop.f32.mrb[0].mxu0
        %v599 = vadd.f32 %v514, %v598
        %v600 = vpop.f32.mrb[0].mxu0
        %601 = vmatprep.mubr.f32.mxu0 0.0
        %602 = vmatmul.mubr.f32.gmra.mrb[0].mxu0 %v383
        %v603 = vpop.f32.mrb[0].mxu0
        %v604 = vadd.f32 %v519, %v603
        %v605 = vpop.f32.mrb[0].mxu0
        %606 = vmatprep.mubr.f32.mxu0 0.0
        %607 = vmatmul.mubr.f32.gmra.mrb[0].mxu0 %v385
        %v608 = vpop.f32.mrb[0].mxu0
        %v609 = vadd.f32 %v524, %v608
        %v610 = vpop.f32.mrb[0].mxu0
        %611 = vmatprep.mubr.f32.mxu0 0.0
        %612 = vmatmul.mubr.f32.gmra.mrb[0].mxu0 %v387
        %v613 = vpop.f32.mrb[0].mxu0
        %v614 = vadd.f32 %v529, %v613
        %v615 = vpop.f32.mrb[0].mxu0
        %616 = vdwg.mxu0
        %v617 = vmax.f32 %v599, 0.0
        %v618 = vmax.f32 %v604, 0.0
        %v619 = vmax.f32 %v609, 0.0
        %v620 = vmax.f32 %v614, 0.0
        %v625 = vrot.slane %v617, 1
        %v626 = vrot.slane %v618, 1
        %v627 = vsel %vm364, %v625, %v626
        %v628 = vrot.slane %v619, 1
        %v629 = vsel %vm364, %v626, %v628
        %v630 = vrot.slane %v620, 1
        %v631 = vsel %vm364, %v628, %v630
        %v635 = vrot.slane %v617, 2
        %v636 = vrot.slane %v618, 2
        %v637 = vsel %vm378, %v635, %v636
        %v638 = vrot.slane %v619, 2
        %v639 = vsel %vm378, %v636, %v638
        %v640 = vrot.slane %v620, 2
        %v641 = vsel %vm378, %v638, %v640
        %v645 = vld [vmem:[#allocation7] sm:$0xff]
        %v646 = vld [vmem:[#allocation7 + $0x8] sm:$0xff]
        %v647 = vld [vmem:[#allocation7 + $0x10] sm:$0xff]
        %v648 = vld [vmem:[#allocation7 + $0x18] sm:$0xff]
        %v649 = vld [vmem:[#allocation7 + $0x20] sm:$0xff]
        %v650 = vld [vmem:[#allocation7 + $0x28] sm:$0xff]
        %v651 = vld [vmem:[#allocation7 + $0x30] sm:$0xff]
        %v652 = vld [vmem:[#allocation7 + $0x38] sm:$0xff]
        %v653 = vld [vmem:[#allocation7 + $0x40] sm:$0xff]
        %v654 = vld [vmem:[#allocation7 + $0x48] sm:$0xff]
        %v655 = vld [vmem:[#allocation7 + $0x50] sm:$0xff]
        %v656 = vld [vmem:[#allocation7 + $0x58] sm:$0xff]
        %v657 = vld [vmem:[#allocation7 + $0x60] sm:$0xff]
        %v658 = vld [vmem:[#allocation7 + $0x68] sm:$0xff]
        %v659 = vld [vmem:[#allocation7 + $0x70] sm:$0xff]
        %v660 = vld [vmem:[#allocation7 + $0x78] sm:$0xff]
        %v661 = vld [vmem:[#allocation7 + $0x80] sm:$0xff]
        %v662 = vld [vmem:[#allocation7 + $0x88] sm:$0xff]
        %v663 = vld [vmem:[#allocation7 + $0x90] sm:$0xff]
        %v664 = vld [vmem:[#allocation7 + $0x98] sm:$0xff]
        %v665 = vld [vmem:[#allocation7 + $0xa0] sm:$0xff]
        %v666 = vld [vmem:[#allocation7 + $0xa8] sm:$0xff]
        %v667 = vld [vmem:[#allocation7 + $0xb0] sm:$0xff]
        %v668 = vld [vmem:[#allocation7 + $0xb8] sm:$0xff]
        %v669 = vld [vmem:[#allocation7 + $0xc0] sm:$0xff]
        %v670 = vld [vmem:[#allocation7 + $0xc8] sm:$0xff]
        %v671 = vld [vmem:[#allocation7 + $0xd0] sm:$0xff]
        %v672 = vld [vmem:[#allocation7 + $0xd8] sm:$0xff]
        %v673 = vld [vmem:[#allocation7 + $0xe0] sm:$0xff]
        %v674 = vld [vmem:[#allocation7 + $0xe8] sm:$0xff]
        %v675 = vld [vmem:[#allocation7 + $0xf0] sm:$0xff]
        %v676 = vld [vmem:[#allocation7 + $0xf8] sm:$0xff]
        %v677 = vld [vmem:[#allocation7 + $0x100] sm:$0xff]
        %v678 = vld [vmem:[#allocation7 + $0x108] sm:$0xff]
        %v679 = vld [vmem:[#allocation7 + $0x110] sm:$0xff]
        %v680 = vld [vmem:[#allocation7 + $0x118] sm:$0xff]
        %v681 = vld [vmem:[#allocation7 + $0x120] sm:$0xff]
        %v682 = vld [vmem:[#allocation7 + $0x128] sm:$0xff]
        %v683 = vld [vmem:[#allocation7 + $0x130] sm:$0xff]
        %v684 = vld [vmem:[#allocation7 + $0x138] sm:$0xff]
        %v685 = vld [vmem:[#allocation7 + $0x140] sm:$0xff]
        %v686 = vld [vmem:[#allocation7 + $0x148] sm:$0xff]
        %v687 = vld [vmem:[#allocation7 + $0x150] sm:$0xff]
        %v688 = vld [vmem:[#allocation7 + $0x158] sm:$0xff]
        %v689 = vld [vmem:[#allocation7 + $0x160] sm:$0xff]
        %v690 = vld [vmem:[#allocation7 + $0x168] sm:$0xff]
        %v691 = vld [vmem:[#allocation7 + $0x170] sm:$0xff]
        %v692 = vld [vmem:[#allocation7 + $0x178] sm:$0xff]
        %v693 = vld [vmem:[%s4] sm:$0x1]
        %v695 = vlaneseq
        %v696 = vshrl.u32 %v695, 7
        %v697 = vsub.s32 0, %v696
        %v698 = vrot.slane %v693, %v697
        %700 = vmatprep.subr.mxu0 0.0
        %701 = vmatpush1.msra.mxu0 %v645
        %702 = vmatprep.subr.mxu0 0.0
        %703 = vmatpush1.msra.mxu0 %v646
        %704 = vmatprep.subr.mxu0 0.0
        %705 = vmatpush1.msra.mxu0 %v647
        %706 = vmatprep.subr.mxu0 0.0
        %707 = vmatpush1.msra.mxu0 %v648
        %708 = vmatprep.subr.mxu0 0.0
        %709 = vmatpush1.msra.mxu0 %v649
        %710 = vmatprep.subr.mxu0 0.0
        %711 = vmatpush1.msra.mxu0 %v650
        %712 = vmatprep.subr.mxu0 0.0
        %713 = vmatpush1.msra.mxu0 %v651
        %714 = vmatprep.subr.mxu0 0.0
        %715 = vmatpush1.msra.mxu0 %v652
        %716 = vmatprep.subr.mxu0 0.0
        %717 = vmatpush1.msra.mxu0 %v653
        %718 = vmatprep.subr.mxu0 0.0
        %719 = vmatpush1.msra.mxu0 %v654
        %720 = vmatprep.subr.mxu0 0.0
        %721 = vmatpush1.msra.mxu0 %v655
        %722 = vmatprep.subr.mxu0 0.0
        %723 = vmatpush1.msra.mxu0 %v656
        %724 = vmatprep.subr.mxu0 0.0
        %725 = vmatpush1.msra.mxu0 %v657
        %726 = vmatprep.subr.mxu0 0.0
        %727 = vmatpush1.msra.mxu0 %v658
        %728 = vmatprep.subr.mxu0 0.0
        %729 = vmatpush1.msra.mxu0 %v659
        %730 = vmatprep.subr.mxu0 0.0
        %731 = vmatpush1.msra.mxu0 %v660
        %732 = vmatprep.subr.mxu0 0.0
        %733 = vmatpush1.msra.mxu0 %v661
        %734 = vmatprep.subr.mxu0 0.0
        %735 = vmatpush1.msra.mxu0 %v662
        %736 = vmatprep.subr.mxu0 0.0
        %737 = vmatpush1.msra.mxu0 %v663
        %738 = vmatprep.subr.mxu0 0.0
        %739 = vmatpush1.msra.mxu0 %v664
        %740 = vmatprep.subr.mxu0 0.0
        %741 = vmatpush1.msra.mxu0 %v665
        %742 = vmatprep.subr.mxu0 0.0
        %743 = vmatpush1.msra.mxu0 %v666
        %744 = vmatprep.subr.mxu0 0.0
        %745 = vmatpush1.msra.mxu0 %v667
        %746 = vmatprep.subr.mxu0 0.0
        %747 = vmatpush1.msra.mxu0 %v668
        %748 = vmatprep.subr.mxu0 0.0
        %749 = vmatpush1.msra.mxu0 %v669
        %750 = vmatprep.subr.mxu0 0.0
        %751 = vmatpush1.msra.mxu0 %v670
        %752 = vmatprep.subr.mxu0 0.0
        %753 = vmatpush1.msra.mxu0 %v671
        %754 = vmatprep.subr.mxu0 0.0
        %755 = vmatpush1.msra.mxu0 %v672
        %756 = vmatprep.subr.mxu0 0.0
        %757 = vmatpush1.msra.mxu0 %v673
        %758 = vmatprep.subr.mxu0 0.0
        %759 = vmatpush1.msra.mxu0 %v674
        %760 = vmatprep.subr.mxu0 0.0
        %761 = vmatpush1.msra.mxu0 %v675
        %762 = vmatprep.subr.mxu0 0.0
        %763 = vmatpush1.msra.mxu0 %v676
        %764 = vmatprep.mubr.f32.mxu0 %v627
        %765 = vmatmul.mubr.f32.gmra.mrb[0].mxu0 %v617
        %v766 = vpop.f32.mrb[0].mxu0
        %v767 = vadd.f32 %v698, %v766
        %v768 = vpop.f32.mrb[0].mxu0
        %769 = vmatprep.mubr.f32.mxu0 %v629
        %770 = vmatmul.mubr.f32.gmra.mrb[0].mxu0 %v618
        %v771 = vpop.f32.mrb[0].mxu0
        %v772 = vadd.f32 %v698, %v771
        %v773 = vpop.f32.mrb[0].mxu0
        %774 = vmatprep.mubr.f32.mxu0 %v631
        %775 = vmatmul.mubr.f32.gmra.mrb[0].mxu0 %v619
        %v776 = vpop.f32.mrb[0].mxu0
        %v777 = vadd.f32 %v698, %v776
        %v778 = vpop.f32.mrb[0].mxu0
        %779 = vdwg.mxu0
        %780 = vmatprep.subr.mxu0 0.0
        %781 = vmatpush1.msra.mxu0 %v677
        %782 = vmatprep.subr.mxu0 0.0
        %783 = vmatpush1.msra.mxu0 %v678
        %784 = vmatprep.subr.mxu0 0.0
        %785 = vmatpush1.msra.mxu0 %v679
        %786 = vmatprep.subr.mxu0 0.0
        %787 = vmatpush1.msra.mxu0 %v680
        %788 = vmatprep.subr.mxu0 0.0
        %789 = vmatpush1.msra.mxu0 %v681
        %790 = vmatprep.subr.mxu0 0.0
        %791 = vmatpush1.msra.mxu0 %v682
        %792 = vmatprep.subr.mxu0 0.0
        %793 = vmatpush1.msra.mxu0 %v683
        %794 = vmatprep.subr.mxu0 0.0
        %795 = vmatpush1.msra.mxu0 %v684
        %796 = vmatprep.subr.mxu0 0.0
        %797 = vmatpush1.msra.mxu0 %v685
        %798 = vmatprep.subr.mxu0 0.0
        %799 = vmatpush1.msra.mxu0 %v686
        %800 = vmatprep.subr.mxu0 0.0
        %801 = vmatpush1.msra.mxu0 %v687
        %802 = vmatprep.subr.mxu0 0.0
        %803 = vmatpush1.msra.mxu0 %v688
        %804 = vmatprep.subr.mxu0 0.0
        %805 = vmatpush1.msra.mxu0 %v689
        %806 = vmatprep.subr.mxu0 0.0
        %807 = vmatpush1.msra.mxu0 %v690
        %808 = vmatprep.subr.mxu0 0.0
        %809 = vmatpush1.msra.mxu0 %v691
        %810 = vmatprep.subr.mxu0 0.0
        %811 = vmatpush1.msra.mxu0 %v692
        %812 = vmatprep.subr.mxu0 0.0
        %813 = vmatpush1.msra.mxu0 0.0
        %814 = vmatprep.subr.mxu0 0.0
        %815 = vmatpush1.msra.mxu0 0.0
        %816 = vmatprep.subr.mxu0 0.0
        %817 = vmatpush1.msra.mxu0 0.0
        %818 = vmatprep.subr.mxu0 0.0
        %819 = vmatpush1.msra.mxu0 0.0
        %820 = vmatprep.subr.mxu0 0.0
        %821 = vmatpush1.msra.mxu0 0.0
        %822 = vmatprep.subr.mxu0 0.0
        %823 = vmatpush1.msra.mxu0 0.0
        %824 = vmatprep.subr.mxu0 0.0
        %825 = vmatpush1.msra.mxu0 0.0
        %826 = vmatprep.subr.mxu0 0.0
        %827 = vmatpush1.msra.mxu0 0.0
        %828 = vmatprep.subr.mxu0 0.0
        %829 = vmatpush1.msra.mxu0 0.0
        %830 = vmatprep.subr.mxu0 0.0
        %831 = vmatpush1.msra.mxu0 0.0
        %832 = vmatprep.subr.mxu0 0.0
        %833 = vmatpush1.msra.mxu0 0.0
        %834 = vmatprep.subr.mxu0 0.0
        %835 = vmatpush1.msra.mxu0 0.0
        %836 = vmatprep.subr.mxu0 0.0
        %837 = vmatpush1.msra.mxu0 0.0
        %838 = vmatprep.subr.mxu0 0.0
        %839 = vmatpush1.msra.mxu0 0.0
        %840 = vmatprep.subr.mxu0 0.0
        %841 = vmatpush1.msra.mxu0 0.0
        %842 = vmatprep.subr.mxu0 0.0
        %843 = vmatpush1.msra.mxu0 0.0
        %844 = vmatprep.mubr.f32.mxu0 0.0
        %845 = vmatmul.mubr.f32.gmra.mrb[0].mxu0 %v637
        %v846 = vpop.f32.mrb[0].mxu0
        %v847 = vadd.f32 %v767, %v846
        %v848 = vpop.f32.mrb[0].mxu0
        %849 = vmatprep.mubr.f32.mxu0 0.0
        %850 = vmatmul.mubr.f32.gmra.mrb[0].mxu0 %v639
        %v851 = vpop.f32.mrb[0].mxu0
        %v852 = vadd.f32 %v772, %v851
        %v853 = vpop.f32.mrb[0].mxu0
        %854 = vmatprep.mubr.f32.mxu0 0.0
        %855 = vmatmul.mubr.f32.gmra.mrb[0].mxu0 %v641
        %v856 = vpop.f32.mrb[0].mxu0
        %v857 = vadd.f32 %v777, %v856
        %v858 = vpop.f32.mrb[0].mxu0
        %859 = vdwg.mxu0
        %v860 = vmax.f32 %v847, 0.0
        %v861 = vmax.f32 %v852, 0.0
        %v862 = vmax.f32 %v857, 0.0
        %v866 = vrot.slane %v860, 1
        %v867 = vrot.slane %v861, 1
        %v868 = vsel %vm364, %v866, %v867
        %v869 = vrot.slane %v862, 1
        %v870 = vsel %vm364, %v867, %v869
        %v873 = vrot.slane %v860, 2
        %v874 = vrot.slane %v861, 2
        %v875 = vsel %vm378, %v873, %v874
        %v876 = vrot.slane %v862, 2
        %v877 = vsel %vm378, %v874, %v876
        %v880 = vld [vmem:[#allocation9] sm:$0xff]
        %v881 = vld [vmem:[#allocation9 + $0x8] sm:$0xff]
        %v882 = vld [vmem:[#allocation9 + $0x10] sm:$0xff]
        %v883 = vld [vmem:[#allocation9 + $0x18] sm:$0xff]
        %v884 = vld [vmem:[#allocation9 + $0x20] sm:$0xff]
        %v885 = vld [vmem:[#allocation9 + $0x28] sm:$0xff]
        %v886 = vld [vmem:[#allocation9 + $0x30] sm:$0xff]
        %v887 = vld [vmem:[#allocation9 + $0x38] sm:$0xff]
        %v888 = vld [vmem:[#allocation9 + $0x40] sm:$0xff]
        %v889 = vld [vmem:[#allocation9 + $0x48] sm:$0xff]
        %v890 = vld [vmem:[#allocation9 + $0x50] sm:$0xff]
        %v891 = vld [vmem:[#allocation9 + $0x58] sm:$0xff]
        %v892 = vld [vmem:[#allocation9 + $0x60] sm:$0xff]
        %v893 = vld [vmem:[#allocation9 + $0x68] sm:$0xff]
        %v894 = vld [vmem:[#allocation9 + $0x70] sm:$0xff]
        %v895 = vld [vmem:[#allocation9 + $0x78] sm:$0xff]
        %v896 = vld [vmem:[#allocation9 + $0x80] sm:$0xff]
        %v897 = vld [vmem:[#allocation9 + $0x88] sm:$0xff]
        %v898 = vld [vmem:[#allocation9 + $0x90] sm:$0xff]
        %v899 = vld [vmem:[#allocation9 + $0x98] sm:$0xff]
        %v900 = vld [vmem:[#allocation9 + $0xa0] sm:$0xff]
        %v901 = vld [vmem:[#allocation9 + $0xa8] sm:$0xff]
        %v902 = vld [vmem:[#allocation9 + $0xb0] sm:$0xff]
        %v903 = vld [vmem:[#allocation9 + $0xb8] sm:$0xff]
        %v904 = vld [vmem:[#allocation9 + $0xc0] sm:$0xff]
        %v905 = vld [vmem:[#allocation9 + $0xc8] sm:$0xff]
        %v906 = vld [vmem:[#allocation9 + $0xd0] sm:$0xff]
        %v907 = vld [vmem:[#allocation9 + $0xd8] sm:$0xff]
        %v908 = vld [vmem:[#allocation9 + $0xe0] sm:$0xff]
        %v909 = vld [vmem:[#allocation9 + $0xe8] sm:$0xff]
        %v910 = vld [vmem:[#allocation9 + $0xf0] sm:$0xff]
        %v911 = vld [vmem:[#allocation9 + $0xf8] sm:$0xff]
        %v912 = vld [vmem:[#allocation9 + $0x100] sm:$0xff]
        %v913 = vld [vmem:[#allocation9 + $0x108] sm:$0xff]
        %v914 = vld [vmem:[#allocation9 + $0x110] sm:$0xff]
        %v915 = vld [vmem:[#allocation9 + $0x118] sm:$0xff]
        %v916 = vld [vmem:[#allocation9 + $0x120] sm:$0xff]
        %v917 = vld [vmem:[#allocation9 + $0x128] sm:$0xff]
        %v918 = vld [vmem:[#allocation9 + $0x130] sm:$0xff]
        %v919 = vld [vmem:[#allocation9 + $0x138] sm:$0xff]
        %v920 = vld [vmem:[#allocation9 + $0x140] sm:$0xff]
        %v921 = vld [vmem:[#allocation9 + $0x148] sm:$0xff]
        %v922 = vld [vmem:[#allocation9 + $0x150] sm:$0xff]
        %v923 = vld [vmem:[#allocation9 + $0x158] sm:$0xff]
        %v924 = vld [vmem:[#allocation9 + $0x160] sm:$0xff]
        %v925 = vld [vmem:[#allocation9 + $0x168] sm:$0xff]
        %v926 = vld [vmem:[#allocation9 + $0x170] sm:$0xff]
        %v927 = vld [vmem:[#allocation9 + $0x178] sm:$0xff]
        %v928 = vld [vmem:[%s6] sm:$0x1]
        %v930 = vlaneseq
        %v931 = vshrl.u32 %v930, 7
        %v932 = vsub.s32 0, %v931
        %v933 = vrot.slane %v928, %v932
        %935 = vmatprep.subr.mxu0 0.0
        %936 = vmatpush1.msra.mxu0 %v880
        %937 = vmatprep.subr.mxu0 0.0
        %938 = vmatpush1.msra.mxu0 %v881
        %939 = vmatprep.subr.mxu0 0.0
        %940 = vmatpush1.msra.mxu0 %v882
        %941 = vmatprep.subr.mxu0 0.0
        %942 = vmatpush1.msra.mxu0 %v883
        %943 = vmatprep.subr.mxu0 0.0
        %944 = vmatpush1.msra.mxu0 %v884
        %945 = vmatprep.subr.mxu0 0.0
        %946 = vmatpush1.msra.mxu0 %v885
        %947 = vmatprep.subr.mxu0 0.0
        %948 = vmatpush1.msra.mxu0 %v886
        %949 = vmatprep.subr.mxu0 0.0
        %950 = vmatpush1.msra.mxu0 %v887
        %951 = vmatprep.subr.mxu0 0.0
        %952 = vmatpush1.msra.mxu0 %v888
        %953 = vmatprep.subr.mxu0 0.0
        %954 = vmatpush1.msra.mxu0 %v889
        %955 = vmatprep.subr.mxu0 0.0
        %956 = vmatpush1.msra.mxu0 %v890
        %957 = vmatprep.subr.mxu0 0.0
        %958 = vmatpush1.msra.mxu0 %v891
        %959 = vmatprep.subr.mxu0 0.0
        %960 = vmatpush1.msra.mxu0 %v892
        %961 = vmatprep.subr.mxu0 0.0
        %962 = vmatpush1.msra.mxu0 %v893
        %963 = vmatprep.subr.mxu0 0.0
        %964 = vmatpush1.msra.mxu0 %v894
        %965 = vmatprep.subr.mxu0 0.0
        %966 = vmatpush1.msra.mxu0 %v895
        %967 = vmatprep.subr.mxu0 0.0
        %968 = vmatpush1.msra.mxu0 %v896
        %969 = vmatprep.subr.mxu0 0.0
        %970 = vmatpush1.msra.mxu0 %v897
        %971 = vmatprep.subr.mxu0 0.0
        %972 = vmatpush1.msra.mxu0 %v898
        %973 = vmatprep.subr.mxu0 0.0
        %974 = vmatpush1.msra.mxu0 %v899
        %975 = vmatprep.subr.mxu0 0.0
        %976 = vmatpush1.msra.mxu0 %v900
        %977 = vmatprep.subr.mxu0 0.0
        %978 = vmatpush1.msra.mxu0 %v901
        %979 = vmatprep.subr.mxu0 0.0
        %980 = vmatpush1.msra.mxu0 %v902
        %981 = vmatprep.subr.mxu0 0.0
        %982 = vmatpush1.msra.mxu0 %v903
        %983 = vmatprep.subr.mxu0 0.0
        %984 = vmatpush1.msra.mxu0 %v904
        %985 = vmatprep.subr.mxu0 0.0
        %986 = vmatpush1.msra.mxu0 %v905
        %987 = vmatprep.subr.mxu0 0.0
        %988 = vmatpush1.msra.mxu0 %v906
        %989 = vmatprep.subr.mxu0 0.0
        %990 = vmatpush1.msra.mxu0 %v907
        %991 = vmatprep.subr.mxu0 0.0
        %992 = vmatpush1.msra.mxu0 %v908
        %993 = vmatprep.subr.mxu0 0.0
        %994 = vmatpush1.msra.mxu0 %v909
        %995 = vmatprep.subr.mxu0 0.0
        %996 = vmatpush1.msra.mxu0 %v910
        %997 = vmatprep.subr.mxu0 0.0
        %998 = vmatpush1.msra.mxu0 %v911
        %999 = vmatprep.mubr.f32.mxu0 %v868
        %1000 = vmatmul.mubr.f32.gmra.mrb[0].mxu0 %v860
        %v1001 = vpop.f32.mrb[0].mxu0
        %v1002 = vadd.f32 %v933, %v1001
        %v1003 = vpop.f32.mrb[0].mxu0
        %1004 = vmatprep.mubr.f32.mxu0 %v870
        %1005 = vmatmul.mubr.f32.gmra.mrb[0].mxu0 %v861
        %v1006 = vpop.f32.mrb[0].mxu0
        %v1007 = vadd.f32 %v933, %v1006
        %v1008 = vpop.f32.mrb[0].mxu0
        %1009 = vdwg.mxu0
        %1010 = vmatprep.subr.mxu0 0.0
        %1011 = vmatpush1.msra.mxu0 %v912
        %1012 = vmatprep.subr.mxu0 0.0
        %1013 = vmatpush1.msra.mxu0 %v913
        %1014 = vmatprep.subr.mxu0 0.0
        %1015 = vmatpush1.msra.mxu0 %v914
        %1016 = vmatprep.subr.mxu0 0.0
        %1017 = vmatpush1.msra.mxu0 %v915
        %1018 = vmatprep.subr.mxu0 0.0
        %1019 = vmatpush1.msra.mxu0 %v916
        %1020 = vmatprep.subr.mxu0 0.0
        %1021 = vmatpush1.msra.mxu0 %v917
        %1022 = vmatprep.subr.mxu0 0.0
        %1023 = vmatpush1.msra.mxu0 %v918
        %1024 = vmatprep.subr.mxu0 0.0
        %1025 = vmatpush1.msra.mxu0 %v919
        %1026 = vmatprep.subr.mxu0 0.0
        %1027 = vmatpush1.msra.mxu0 %v920
        %1028 = vmatprep.subr.mxu0 0.0
        %1029 = vmatpush1.msra.mxu0 %v921
        %1030 = vmatprep.subr.mxu0 0.0
        %1031 = vmatpush1.msra.mxu0 %v922
        %1032 = vmatprep.subr.mxu0 0.0
        %1033 = vmatpush1.msra.mxu0 %v923
        %1034 = vmatprep.subr.mxu0 0.0
        %1035 = vmatpush1.msra.mxu0 %v924
        %1036 = vmatprep.subr.mxu0 0.0
        %1037 = vmatpush1.msra.mxu0 %v925
        %1038 = vmatprep.subr.mxu0 0.0
        %1039 = vmatpush1.msra.mxu0 %v926
        %1040 = vmatprep.subr.mxu0 0.0
        %1041 = vmatpush1.msra.mxu0 %v927
        %1042 = vmatprep.subr.mxu0 0.0
        %1043 = vmatpush1.msra.mxu0 0.0
        %1044 = vmatprep.subr.mxu0 0.0
        %1045 = vmatpush1.msra.mxu0 0.0
        %1046 = vmatprep.subr.mxu0 0.0
        %1047 = vmatpush1.msra.mxu0 0.0
        %1048 = vmatprep.subr.mxu0 0.0
        %1049 = vmatpush1.msra.mxu0 0.0
        %1050 = vmatprep.subr.mxu0 0.0
        %1051 = vmatpush1.msra.mxu0 0.0
        %1052 = vmatprep.subr.mxu0 0.0
        %1053 = vmatpush1.msra.mxu0 0.0
        %1054 = vmatprep.subr.mxu0 0.0
        %1055 = vmatpush1.msra.mxu0 0.0
        %1056 = vmatprep.subr.mxu0 0.0
        %1057 = vmatpush1.msra.mxu0 0.0
        %1058 = vmatprep.subr.mxu0 0.0
        %1059 = vmatpush1.msra.mxu0 0.0
        %1060 = vmatprep.subr.mxu0 0.0
        %1061 = vmatpush1.msra.mxu0 0.0
        %1062 = vmatprep.subr.mxu0 0.0
        %1063 = vmatpush1.msra.mxu0 0.0
        %1064 = vmatprep.subr.mxu0 0.0
        %1065 = vmatpush1.msra.mxu0 0.0
        %1066 = vmatprep.subr.mxu0 0.0
        %1067 = vmatpush1.msra.mxu0 0.0
        %1068 = vmatprep.subr.mxu0 0.0
        %1069 = vmatpush1.msra.mxu0 0.0
        %1070 = vmatprep.subr.mxu0 0.0
        %1071 = vmatpush1.msra.mxu0 0.0
        %1072 = vmatprep.subr.mxu0 0.0
        %1073 = vmatpush1.msra.mxu0 0.0
        %1074 = vmatprep.mubr.f32.mxu0 0.0
        %1075 = vmatmul.mubr.f32.gmra.mrb[0].mxu0 %v875
        %v1076 = vpop.f32.mrb[0].mxu0
        %v1077 = vadd.f32 %v1002, %v1076
        %v1078 = vpop.f32.mrb[0].mxu0
        %1079 = vmatprep.mubr.f32.mxu0 0.0
        %1080 = vmatmul.mubr.f32.gmra.mrb[0].mxu0 %v877
        %v1081 = vpop.f32.mrb[0].mxu0
        %v1082 = vadd.f32 %v1007, %v1081
        %v1083 = vpop.f32.mrb[0].mxu0
        %1084 = vdwg.mxu0
        %v1085 = vmax.f32 %v1077, 0.0
        %v1086 = vmax.f32 %v1082, 0.0
        %1087 = vst [vmem:[%s288] sm:$0xff] %v1085
        %1088 = vst [vmem:[%s288 + $0x8] sm:$0xff] %v1086
        %s1089 = sand.u32 %s171, 1
        %s1090 = scalar_lea.sflag [#allocation6], %s1089
        %s1091 = sand.u32 %s171, 1
        %s1092 = smul.addr %s1091, 16
        %s1093 = scalar_lea.vmem [#allocation10], %s1092
        // Predicated region
        $region73: #{tpu_custom_call.1} parent=43 // pred_check
          %p1094 = pneg %p181
        $region74: #{tpu_custom_call.1} parent=43 // pred_check_branch
          %1096 = sbr.rel (%p1094) target = $region76
        $region75: #{tpu_custom_call.1} parent=43 // pred_region
          %s1097 = smul.u32 2, %s28
          %s1099 = ssub.s32 256, 256
          %1100 = vsyncadd %s1090, %s1099
          %s1101 = smul.addr %s27, 2
          %s1102 = sadd.s32 %s1097, %s1101
          %s1103 = smul.addr %s1102, 128
          %s1104 = scalar_lea.hbm %s7, %s1103
          %s1105 = sshll.u32 %s1093, 4
          %s1106 = int_to_ptr.vmem [resolvable:$true] %s1105
          %1111 = dma.vmem_to_hbm [thread:$0]  %s1106, 256, %s1104, %s1090, 128, 128, 8
        $region76: #{tpu_custom_call.1} parent=43 // pred_fallthru
          _
      $region44: #{tpu_custom_call.1} parent=5 // pred_fallthru
        _
      %p1112 = scmp.le.s32.totalorder 2, %s18
      // Predicated region
      $region77: #{tpu_custom_call.1} parent=5 // pred_check
        %p1113 = pneg %p1112
      $region78: #{tpu_custom_call.1} parent=5 // pred_check_branch
        %1115 = sbr.rel (%p1113) target = $region80
      $region79: #{tpu_custom_call.1} parent=5 // pred_region
        %s1116 = ssub.s32 %s18, 2
        // Predicated region
        $region81: #{tpu_custom_call.1} parent=79 // pred_check
          %p1117 = pneg %p187
        $region82: #{tpu_custom_call.1} parent=79 // pred_check_branch
          %1119 = sbr.rel (%p1117) target = $region84
        $region83: #{tpu_custom_call.1} parent=79 // pred_region
          %s1120 = sand.u32 %s172, 1
          %s1121 = scalar_lea.sflag [#allocation6], %s1120
          %s1122 = sand.u32 %s172, 1
          %s1123 = smul.addr %s1122, 16
          %s1124 = scalar_lea.vmem [#allocation10], %s1123
          %1125 = dma.done %s1121, 256
        $region84: #{tpu_custom_call.1} parent=79 // pred_fallthru
          _
      $region80: #{tpu_custom_call.1} parent=5 // pred_fallthru
        _
    $region6: #{tpu_custom_call.1} parent=1 // loop_footer
      %s22 = sadd.s32 1, %s18
    $region7: #{tpu_custom_call.1} parent=1 // loop_footer_branch
      %17 = sbr.rel target = $region3
    $region8: #{tpu_custom_call.1} parent=1 // loop_exit
      _
    %1126 = vsyncpa [#allocation5], 1
    %s1127 = scalar_lea.sflag [#allocation5], 1
    %1128 = vsyncpa %s1127, 1
    %1129 = vsyncpa [#allocation8], 1
    %1130 = vsyncpa [#allocation6], 1
    %s1131 = scalar_lea.sflag [#allocation6], 1
    %1132 = vsyncpa %s1131, 1
  %1133 = vsyncmov [#allocation3]
  %s1134 = vpop.sfrf %1133
  %p1135 = scmp.eq.s32.totalorder %s1134, 0
  %p1136 = pneg %p1135
  %1138 = shalt.err (%p1136)
  %s1139 = scalar_lea.sflag [#allocation3], 1
  %1140 = vsyncmov %s1139
  %s1141 = vpop.sfrf %1140
  %p1142 = scmp.eq.s32.totalorder %s1141, 0
  %p1143 = pneg %p1142
  %1145 = shalt.err (%p1143)

</llo_original>
